<compile_context>
chip_gen: v5e
topology: v5e:2x2
jax: 0.10.0
libtpu: 0.0.40
codegen_flags: <defaults>
</compile_context>

<pallas_src>
import functools

import jax
import jax.numpy as jnp
import numpy as np
from jax.experimental import pallas as pl
from jax.experimental.pallas import tpu as pltpu


# Output component i uses stencil j applied to input channel _CH[i][j].
_CH = ((0, 1, 2), (1, 3, 4), (2, 4, 5))
# For each input channel c: which (output i, stencil j) pairs consume it.
_USERS = tuple(
    tuple((i, j) for i in range(3) for j in range(3) if _CH[i][j] == c)
    for c in range(6)
)


def _div_kernel(H, W, NB, static_w, *refs):
    """Circular 3x3x3 cross-correlation divergence for NB batch elements.

    Layout: last ref axis is the flattened HW (lane axis), D sits on sublanes.

    refs (dynamic weights): w_ref SMEM (81,) f32, x_ref VMEM (NB,6,D,HW), o_ref VMEM (NB,3,D,HW)
    refs (static weights):  x_ref, o_ref  (weights baked in at trace time, zero taps skipped)
    """
    if static_w is None:
        w_ref, x_ref, o_ref = refs
        # Hoist: read all 81 stencil weights out of SMEM exactly once.
        wvals = [w_ref[t] for t in range(81)]
    else:
        x_ref, o_ref = refs
        wvals = list(static_w)

    D = x_ref.shape[2]
    HW = H * W

    # Lane-position masks for the within-row (W) circular wrap (computed once).
    lane = jax.lax.broadcasted_iota(jnp.int32, (D, HW), 1)
    w_pos = lane % W
    at_w_first = w_pos == 0
    at_w_last = w_pos == W - 1

    def gather_flat(a, s):
        # result[:, f] = a[:, (f + s) mod HW]   (pltpu.roll follows jnp.roll semantics)
        return pltpu.roll(a, (-s) % HW, 1)

    def shift_x(a, d):
        # value at (h, (w + d) mod W), d in {-1, 0, +1}
        if d == 0:
            return a
        if d > 0:
            return jnp.where(at_w_last, gather_flat(a, 1 - W), gather_flat(a, 1))
        return jnp.where(at_w_first, gather_flat(a, W - 1), gather_flat(a, -1))

    def shift_y(a, d):
        # value at ((h + d) mod H, w): the H wrap coincides with the flattened-axis
        # wrap, so this is a single circular roll -- no boundary select needed.
        if d == 0:
            return a
        return gather_flat(a, d * W)

    def shift_z(a, d):
        # value at ((z + d) mod D, :) -- rotation along the sublane/major axis 0.
        if d == 0:
            return a
        return pltpu.roll(a, (-d) % D, 0)

    for nb in range(NB):
        # P[i][dz] = sum_j sum_{dy,dx} k[j,dz,dy,dx] * shift_{y,x}(x[CH[i][j]], dy-1, dx-1)
        P = [[None] * 3 for _ in range(3)]

        for c in range(6):
            users = _USERS[c]
            xc = x_ref[nb, c, :, :]  # (D, HW)
            # Consume each shifted variant immediately: only xc, xdx, var and the nine
            # accumulators are live at any point (no 9-variant table).
            for dx in range(3):
                xdx = shift_x(xc, dx - 1)
                for dy in range(3):
                    var = shift_y(xdx, dy - 1)
                    for (i, j) in users:
                        for dz in range(3):
                            w = wvals[((j * 3 + dz) * 3 + dy) * 3 + dx]
                            if static_w is not None and w == 0.0:
                                continue  # trace-time dead-tap elimination
                            term = w * var
                            P[i][dz] = term if P[i][dz] is None else P[i][dz] + term

        # Combine the dz taps with two cheap sublane rolls per output component; each
        # output vreg is written exactly once.
        for i in range(3):
            terms = []
            if P[i][0] is not None:
                terms.append(shift_z(P[i][0], -1))
            if P[i][1] is not None:
                terms.append(P[i][1])
            if P[i][2] is not None:
                terms.append(shift_z(P[i][2], +1))
            if terms:
                out_i = terms[0]
                for t in terms[1:]:
                    out_i = out_i + t
            else:
                out_i = jnp.zeros((D, HW), o_ref.dtype)
            o_ref[nb, i, :, :] = out_i.astype(o_ref.dtype)


def _pick_batch_block(N, per_batch_in_bytes, target_bytes=2 << 20):
    """Largest NB dividing N with per-step input block <= target, keeping >= 2 grid steps."""
    best = 1
    for nb in range(1, N + 1):
        if N % nb:
            continue
        if nb * per_batch_in_bytes > target_bytes:
            continue
        if N >= 2 and (N // nb) < 2:
            continue  # keep >= 2 grid steps: pipelining + v7x 2-TC sharding
        best = max(best, nb)
    return best


def div_sig_vector_pallas(sig_fft, kernels, *, static_weights=False):
    """sig_fft: (N, 6, D, H, W) f32; kernels: (3, 3, 3, 3) f32 -> (N, 3, D, H, W)."""
    N, C, D, H, W = sig_fft.shape
    assert C == 6, "expected 6 symmetric stress components"
    HW = H * W  # lane-dense when HW is a multiple of 128 (D multiple of 8 fills sublanes)

    x = sig_fft.reshape(N, C, D, HW)  # flatten (H, W) onto the lane axis

    # Coarsen each grid step for small volumes so per-step I/O isn't overhead-bound.
    per_batch_in_bytes = C * D * HW * 4
    NB = _pick_batch_block(N, per_batch_in_bytes)
    G = N // NB

    # TODO(synk): add a D-tiling grid axis with a +-1 z-halo for very large volumes
    # (D*H*W far beyond the few-MiB-per-block sweet spot / v7x's 64 MiB VMEM).

    in_block = NB * C * D * HW * 4
    out_block = NB * 3 * D * HW * 4
    # double-buffered in/out blocks + ~12 live (D, HW) f32 intermediates
    vmem_needed = 2 * (in_block + out_block) + 12 * D * HW * 4
    vmem_limit = int(vmem_needed * 3 // 2) if vmem_needed > (16 << 20) else None

    cost = pl.CostEstimate(
        flops=486 * N * D * H * W,               # 3 comps * 3 stencils * 27 taps * (mul+add)
        transcendentals=0,
        bytes_accessed=(6 + 3) * 4 * N * D * H * W,
    )
    cparams = pltpu.CompilerParams(
        dimension_semantics=("parallel",),
        vmem_limit_bytes=vmem_limit,
    )
    out_shape = jax.ShapeDtypeStruct((N, 3, D, HW), sig_fft.dtype)

    if static_weights:
        w_static = tuple(
            float(v) for v in np.asarray(jax.device_get(kernels), np.float32).reshape(-1)
        )
        grid_spec = pltpu.PrefetchScalarGridSpec(
            num_scalar_prefetch=0,
            grid=(G,),
            in_specs=[pl.BlockSpec((NB, C, D, HW), lambda n: (n, 0, 0, 0))],
            out_specs=pl.BlockSpec((NB, 3, D, HW), lambda n: (n, 0, 0, 0)),
        )
        out = pl.pallas_call(
            functools.partial(_div_kernel, H, W, NB, w_static),
            out_shape=out_shape,
            grid_spec=grid_spec,
            compiler_params=cparams,
            cost_estimate=cost,
        )(x)
    else:
        w_flat = kernels.reshape(-1).astype(jnp.float32)  # (81,) stencil weights -> SMEM
        grid_spec = pltpu.PrefetchScalarGridSpec(
            num_scalar_prefetch=1,
            grid=(G,),
            in_specs=[pl.BlockSpec((NB, C, D, HW), lambda n, w: (n, 0, 0, 0))],
            out_specs=pl.BlockSpec((NB, 3, D, HW), lambda n, w: (n, 0, 0, 0)),
        )
        out = pl.pallas_call(
            functools.partial(_div_kernel, H, W, NB, None),
            out_shape=out_shape,
            grid_spec=grid_spec,
            compiler_params=cparams,
            cost_estimate=cost,
        )(w_flat, x)

    return out.reshape(N, 3, D, H, W)


def div_sig_vector_ref(sig_fft, kernels):
    """Pure-JAX reference: circular 3x3x3 cross-correlation per the PyTorch module."""
    N, C, D, H, W = sig_fft.shape
    comps = []
    for i in range(3):
        acc = jnp.zeros((N, D, H, W), jnp.float32)
        for j in range(3):
            xx = sig_fft[:, _CH[i][j]]  # (N, D, H, W)
            for dz in range(3):
                for dy in range(3):
                    for dx in range(3):
                        acc = acc + kernels[j, dz, dy, dx] * jnp.roll(
                            xx, shift=(-(dz - 1), -(dy - 1), -(dx - 1)), axis=(1, 2, 3)
                        )
        comps.append(acc)
    return jnp.stack(comps, axis=1)  # (N, 3, D, H, W)


if __name__ == "__main__":
    key = jax.random.PRNGKey(0)
    k_sig, k_ker = jax.random.split(key)

    # Small shapes consistent with the module: batch=2, 6 stress channels, spatial 8x16x16.
    # H*W = 256 -> two full lane-tiles; D = 8 -> full sublanes.
    N, D, H, W = 2, 8, 16, 16
    sig = jax.random.normal(k_sig, (N, 6, D, H, W), dtype=jnp.float32)
    kernels = jax.random.normal(k_ker, (3, 3, 3, 3), dtype=jnp.float32)

    # Dynamic-weight path (faithful to the module: kernels are runtime parameters).
    out = jax.block_until_ready(div_sig_vector_pallas(sig, kernels))
    ref = jax.block_until_ready(div_sig_vector_ref(sig, kernels))
    assert out.shape == (N, 3, D, H, W)
    assert jnp.allclose(out, ref, atol=1e-3, rtol=1e-4), "dynamic-weight path mismatch"

    # Static-weight path (central-difference stencils): trace-time zero-tap elimination.
    kern_cd = np.zeros((3, 3, 3, 3), np.float32)
    kern_cd[0, 1, 1, 0], kern_cd[0, 1, 1, 2] = -0.5, 0.5   # d/dx
    kern_cd[1, 1, 0, 1], kern_cd[1, 1, 2, 1] = -0.5, 0.5   # d/dy
    kern_cd[2, 0, 1, 1], kern_cd[2, 2, 1, 1] = -0.5, 0.5   # d/dz
    kern_cd = jnp.asarray(kern_cd)
    out_s = jax.block_until_ready(div_sig_vector_pallas(sig, kern_cd, static_weights=True))
    ref_s = jax.block_until_ready(div_sig_vector_ref(sig, kern_cd))
    assert jnp.allclose(out_s, ref_s, atol=1e-3, rtol=1e-4), "static-weight path mismatch"

    print("KERNEL_OK")
</pallas_src>

<mosaic_0001>
module attributes {stable_mosaic.version = 11 : i64} {
  func.func @_div_kernel(%arg0: i32, %arg1: memref<81xf32, #tpu.memory_space<smem>>, %arg2: memref<1x6x8x256xf32, #tpu.memory_space<vmem>>, %arg3: memref<1x3x8x256xf32, #tpu.memory_space<vmem>>) attributes {dimension_semantics = [#tpu.dimension_semantics<parallel>], iteration_bounds = array<i64: 2>, scalar_prefetch = 1 : i64, scratch_operands = 0 : i64, tpu.core_type = #tpu.core_type<tc>, window_params = [{transform_indices = @transform_0, window_bounds = array<i64: 1, 6, 8, 256>}, {transform_indices = @transform_1, window_bounds = array<i64: 1, 3, 8, 256>}]} {
    %c0 = arith.constant 0 : index
    %0 = memref.load %arg1[%c0] : memref<81xf32, #tpu.memory_space<smem>>
    %c1 = arith.constant 1 : index
    %1 = memref.load %arg1[%c1] : memref<81xf32, #tpu.memory_space<smem>>
    %c2 = arith.constant 2 : index
    %2 = memref.load %arg1[%c2] : memref<81xf32, #tpu.memory_space<smem>>
    %c3 = arith.constant 3 : index
    %3 = memref.load %arg1[%c3] : memref<81xf32, #tpu.memory_space<smem>>
    %c4 = arith.constant 4 : index
    %4 = memref.load %arg1[%c4] : memref<81xf32, #tpu.memory_space<smem>>
    %c5 = arith.constant 5 : index
    %5 = memref.load %arg1[%c5] : memref<81xf32, #tpu.memory_space<smem>>
    %c6 = arith.constant 6 : index
    %6 = memref.load %arg1[%c6] : memref<81xf32, #tpu.memory_space<smem>>
    %c7 = arith.constant 7 : index
    %7 = memref.load %arg1[%c7] : memref<81xf32, #tpu.memory_space<smem>>
    %c8 = arith.constant 8 : index
    %8 = memref.load %arg1[%c8] : memref<81xf32, #tpu.memory_space<smem>>
    %c9 = arith.constant 9 : index
    %9 = memref.load %arg1[%c9] : memref<81xf32, #tpu.memory_space<smem>>
    %c10 = arith.constant 10 : index
    %10 = memref.load %arg1[%c10] : memref<81xf32, #tpu.memory_space<smem>>
    %c11 = arith.constant 11 : index
    %11 = memref.load %arg1[%c11] : memref<81xf32, #tpu.memory_space<smem>>
    %c12 = arith.constant 12 : index
    %12 = memref.load %arg1[%c12] : memref<81xf32, #tpu.memory_space<smem>>
    %c13 = arith.constant 13 : index
    %13 = memref.load %arg1[%c13] : memref<81xf32, #tpu.memory_space<smem>>
    %c14 = arith.constant 14 : index
    %14 = memref.load %arg1[%c14] : memref<81xf32, #tpu.memory_space<smem>>
    %c15 = arith.constant 15 : index
    %15 = memref.load %arg1[%c15] : memref<81xf32, #tpu.memory_space<smem>>
    %c16 = arith.constant 16 : index
    %16 = memref.load %arg1[%c16] : memref<81xf32, #tpu.memory_space<smem>>
    %c17 = arith.constant 17 : index
    %17 = memref.load %arg1[%c17] : memref<81xf32, #tpu.memory_space<smem>>
    %c18 = arith.constant 18 : index
    %18 = memref.load %arg1[%c18] : memref<81xf32, #tpu.memory_space<smem>>
    %c19 = arith.constant 19 : index
    %19 = memref.load %arg1[%c19] : memref<81xf32, #tpu.memory_space<smem>>
    %c20 = arith.constant 20 : index
    %20 = memref.load %arg1[%c20] : memref<81xf32, #tpu.memory_space<smem>>
    %c21 = arith.constant 21 : index
    %21 = memref.load %arg1[%c21] : memref<81xf32, #tpu.memory_space<smem>>
    %c22 = arith.constant 22 : index
    %22 = memref.load %arg1[%c22] : memref<81xf32, #tpu.memory_space<smem>>
    %c23 = arith.constant 23 : index
    %23 = memref.load %arg1[%c23] : memref<81xf32, #tpu.memory_space<smem>>
    %c24 = arith.constant 24 : index
    %24 = memref.load %arg1[%c24] : memref<81xf32, #tpu.memory_space<smem>>
    %c25 = arith.constant 25 : index
    %25 = memref.load %arg1[%c25] : memref<81xf32, #tpu.memory_space<smem>>
    %c26 = arith.constant 26 : index
    %26 = memref.load %arg1[%c26] : memref<81xf32, #tpu.memory_space<smem>>
    %c27 = arith.constant 27 : index
    %27 = memref.load %arg1[%c27] : memref<81xf32, #tpu.memory_space<smem>>
    %c28 = arith.constant 28 : index
    %28 = memref.load %arg1[%c28] : memref<81xf32, #tpu.memory_space<smem>>
    %c29 = arith.constant 29 : index
    %29 = memref.load %arg1[%c29] : memref<81xf32, #tpu.memory_space<smem>>
    %c30 = arith.constant 30 : index
    %30 = memref.load %arg1[%c30] : memref<81xf32, #tpu.memory_space<smem>>
    %c31 = arith.constant 31 : index
    %31 = memref.load %arg1[%c31] : memref<81xf32, #tpu.memory_space<smem>>
    %c32 = arith.constant 32 : index
    %32 = memref.load %arg1[%c32] : memref<81xf32, #tpu.memory_space<smem>>
    %c33 = arith.constant 33 : index
    %33 = memref.load %arg1[%c33] : memref<81xf32, #tpu.memory_space<smem>>
    %c34 = arith.constant 34 : index
    %34 = memref.load %arg1[%c34] : memref<81xf32, #tpu.memory_space<smem>>
    %c35 = arith.constant 35 : index
    %35 = memref.load %arg1[%c35] : memref<81xf32, #tpu.memory_space<smem>>
    %c36 = arith.constant 36 : index
    %36 = memref.load %arg1[%c36] : memref<81xf32, #tpu.memory_space<smem>>
    %c37 = arith.constant 37 : index
    %37 = memref.load %arg1[%c37] : memref<81xf32, #tpu.memory_space<smem>>
    %c38 = arith.constant 38 : index
    %38 = memref.load %arg1[%c38] : memref<81xf32, #tpu.memory_space<smem>>
    %c39 = arith.constant 39 : index
    %39 = memref.load %arg1[%c39] : memref<81xf32, #tpu.memory_space<smem>>
    %c40 = arith.constant 40 : index
    %40 = memref.load %arg1[%c40] : memref<81xf32, #tpu.memory_space<smem>>
    %c41 = arith.constant 41 : index
    %41 = memref.load %arg1[%c41] : memref<81xf32, #tpu.memory_space<smem>>
    %c42 = arith.constant 42 : index
    %42 = memref.load %arg1[%c42] : memref<81xf32, #tpu.memory_space<smem>>
    %c43 = arith.constant 43 : index
    %43 = memref.load %arg1[%c43] : memref<81xf32, #tpu.memory_space<smem>>
    %c44 = arith.constant 44 : index
    %44 = memref.load %arg1[%c44] : memref<81xf32, #tpu.memory_space<smem>>
    %c45 = arith.constant 45 : index
    %45 = memref.load %arg1[%c45] : memref<81xf32, #tpu.memory_space<smem>>
    %c46 = arith.constant 46 : index
    %46 = memref.load %arg1[%c46] : memref<81xf32, #tpu.memory_space<smem>>
    %c47 = arith.constant 47 : index
    %47 = memref.load %arg1[%c47] : memref<81xf32, #tpu.memory_space<smem>>
    %c48 = arith.constant 48 : index
    %48 = memref.load %arg1[%c48] : memref<81xf32, #tpu.memory_space<smem>>
    %c49 = arith.constant 49 : index
    %49 = memref.load %arg1[%c49] : memref<81xf32, #tpu.memory_space<smem>>
    %c50 = arith.constant 50 : index
    %50 = memref.load %arg1[%c50] : memref<81xf32, #tpu.memory_space<smem>>
    %c51 = arith.constant 51 : index
    %51 = memref.load %arg1[%c51] : memref<81xf32, #tpu.memory_space<smem>>
    %c52 = arith.constant 52 : index
    %52 = memref.load %arg1[%c52] : memref<81xf32, #tpu.memory_space<smem>>
    %c53 = arith.constant 53 : index
    %53 = memref.load %arg1[%c53] : memref<81xf32, #tpu.memory_space<smem>>
    %c54 = arith.constant 54 : index
    %54 = memref.load %arg1[%c54] : memref<81xf32, #tpu.memory_space<smem>>
    %c55 = arith.constant 55 : index
    %55 = memref.load %arg1[%c55] : memref<81xf32, #tpu.memory_space<smem>>
    %c56 = arith.constant 56 : index
    %56 = memref.load %arg1[%c56] : memref<81xf32, #tpu.memory_space<smem>>
    %c57 = arith.constant 57 : index
    %57 = memref.load %arg1[%c57] : memref<81xf32, #tpu.memory_space<smem>>
    %c58 = arith.constant 58 : index
    %58 = memref.load %arg1[%c58] : memref<81xf32, #tpu.memory_space<smem>>
    %c59 = arith.constant 59 : index
    %59 = memref.load %arg1[%c59] : memref<81xf32, #tpu.memory_space<smem>>
    %c60 = arith.constant 60 : index
    %60 = memref.load %arg1[%c60] : memref<81xf32, #tpu.memory_space<smem>>
    %c61 = arith.constant 61 : index
    %61 = memref.load %arg1[%c61] : memref<81xf32, #tpu.memory_space<smem>>
    %c62 = arith.constant 62 : index
    %62 = memref.load %arg1[%c62] : memref<81xf32, #tpu.memory_space<smem>>
    %c63 = arith.constant 63 : index
    %63 = memref.load %arg1[%c63] : memref<81xf32, #tpu.memory_space<smem>>
    %c64 = arith.constant 64 : index
    %64 = memref.load %arg1[%c64] : memref<81xf32, #tpu.memory_space<smem>>
    %c65 = arith.constant 65 : index
    %65 = memref.load %arg1[%c65] : memref<81xf32, #tpu.memory_space<smem>>
    %c66 = arith.constant 66 : index
    %66 = memref.load %arg1[%c66] : memref<81xf32, #tpu.memory_space<smem>>
    %c67 = arith.constant 67 : index
    %67 = memref.load %arg1[%c67] : memref<81xf32, #tpu.memory_space<smem>>
    %c68 = arith.constant 68 : index
    %68 = memref.load %arg1[%c68] : memref<81xf32, #tpu.memory_space<smem>>
    %c69 = arith.constant 69 : index
    %69 = memref.load %arg1[%c69] : memref<81xf32, #tpu.memory_space<smem>>
    %c70 = arith.constant 70 : index
    %70 = memref.load %arg1[%c70] : memref<81xf32, #tpu.memory_space<smem>>
    %c71 = arith.constant 71 : index
    %71 = memref.load %arg1[%c71] : memref<81xf32, #tpu.memory_space<smem>>
    %c72 = arith.constant 72 : index
    %72 = memref.load %arg1[%c72] : memref<81xf32, #tpu.memory_space<smem>>
    %c73 = arith.constant 73 : index
    %73 = memref.load %arg1[%c73] : memref<81xf32, #tpu.memory_space<smem>>
    %c74 = arith.constant 74 : index
    %74 = memref.load %arg1[%c74] : memref<81xf32, #tpu.memory_space<smem>>
    %c75 = arith.constant 75 : index
    %75 = memref.load %arg1[%c75] : memref<81xf32, #tpu.memory_space<smem>>
    %c76 = arith.constant 76 : index
    %76 = memref.load %arg1[%c76] : memref<81xf32, #tpu.memory_space<smem>>
    %c77 = arith.constant 77 : index
    %77 = memref.load %arg1[%c77] : memref<81xf32, #tpu.memory_space<smem>>
    %c78 = arith.constant 78 : index
    %78 = memref.load %arg1[%c78] : memref<81xf32, #tpu.memory_space<smem>>
    %c79 = arith.constant 79 : index
    %79 = memref.load %arg1[%c79] : memref<81xf32, #tpu.memory_space<smem>>
    %c80 = arith.constant 80 : index
    %80 = memref.load %arg1[%c80] : memref<81xf32, #tpu.memory_space<smem>>
    %81 = tpu.iota {dimensions = array<i32: 1>} : vector<8x256xi32>
    %c16_i32 = arith.constant 16 : i32
    %c0_i32 = arith.constant 0 : i32
    %82 = arith.cmpi eq, %c16_i32, %c0_i32 : i32
    %c1_i32 = arith.constant 1 : i32
    %83 = arith.select %82, %c1_i32, %c16_i32 : i32
    %84 = vector.broadcast %83 : i32 to vector<8x256xi32>
    %85 = arith.remsi %81, %84 : vector<8x256xi32>
    %c0_i32_0 = arith.constant 0 : i32
    %86 = vector.broadcast %c0_i32_0 : i32 to vector<8x256xi32>
    %87 = arith.cmpi ne, %85, %86 : vector<8x256xi32>
    %c0_i32_1 = arith.constant 0 : i32
    %88 = vector.broadcast %c0_i32_1 : i32 to vector<8x256xi32>
    %89 = arith.cmpi slt, %85, %88 : vector<8x256xi32>
    %c0_i32_2 = arith.constant 0 : i32
    %90 = arith.cmpi slt, %83, %c0_i32_2 : i32
    %91 = vector.broadcast %90 : i1 to vector<8x256xi1>
    %92 = vector.broadcast %91 : vector<8x256xi1> to vector<8x256xi1>
    %93 = arith.xori %89, %92 : vector<8x256xi1>
    %94 = arith.andi %93, %87 : vector<8x256xi1>
    %95 = vector.broadcast %83 : i32 to vector<8x256xi32>
    %96 = arith.addi %85, %95 : vector<8x256xi32>
    %97 = arith.select %94, %96, %85 : vector<8x256xi1>, vector<8x256xi32>
    %c0_i32_3 = arith.constant 0 : i32
    %98 = vector.broadcast %c0_i32_3 : i32 to vector<8x256xi32>
    %99 = arith.cmpi eq, %97, %98 : vector<8x256xi32>
    %c15_i32 = arith.constant 15 : i32
    %100 = vector.broadcast %c15_i32 : i32 to vector<8x256xi32>
    %101 = arith.cmpi eq, %97, %100 : vector<8x256xi32>
    %c0_4 = arith.constant 0 : index
    %c0_5 = arith.constant 0 : index
    %c0_6 = arith.constant 0 : index
    %c0_7 = arith.constant 0 : index
    %102 = vector.load %arg2[%c0_4, %c0_5, %c0_6, %c0_7] : memref<1x6x8x256xf32, #tpu.memory_space<vmem>>, vector<1x1x8x256xf32>
    %103 = vector.shape_cast %102 : vector<1x1x8x256xf32> to vector<8x256xf32>
    %c241_i32 = arith.constant 241 : i32
    %104 = tpu.dynamic_rotate %103 by %c241_i32 dim 1 : vector<8x256xf32>, i32 -> vector<8x256xf32>
    %c1_i32_8 = arith.constant 1 : i32
    %105 = tpu.dynamic_rotate %103 by %c1_i32_8 dim 1 : vector<8x256xf32>, i32 -> vector<8x256xf32>
    %106 = arith.select %99, %104, %105 : vector<8x256xi1>, vector<8x256xf32>
    %c16_i32_9 = arith.constant 16 : i32
    %107 = tpu.dynamic_rotate %106 by %c16_i32_9 dim 1 : vector<8x256xf32>, i32 -> vector<8x256xf32>
    %108 = vector.broadcast %0 : f32 to vector<8x256xf32>
    %109 = arith.mulf %108, %107 : vector<8x256xf32>
    %110 = vector.broadcast %9 : f32 to vector<8x256xf32>
    %111 = arith.mulf %110, %107 : vector<8x256xf32>
    %112 = vector.broadcast %18 : f32 to vector<8x256xf32>
    %113 = arith.mulf %112, %107 : vector<8x256xf32>
    %114 = vector.broadcast %3 : f32 to vector<8x256xf32>
    %115 = arith.mulf %114, %106 : vector<8x256xf32>
    %116 = arith.addf %109, %115 : vector<8x256xf32>
    %117 = vector.broadcast %12 : f32 to vector<8x256xf32>
    %118 = arith.mulf %117, %106 : vector<8x256xf32>
    %119 = arith.addf %111, %118 : vector<8x256xf32>
    %120 = vector.broadcast %21 : f32 to vector<8x256xf32>
    %121 = arith.mulf %120, %106 : vector<8x256xf32>
    %122 = arith.addf %113, %121 : vector<8x256xf32>
    %c240_i32 = arith.constant 240 : i32
    %123 = tpu.dynamic_rotate %106 by %c240_i32 dim 1 : vector<8x256xf32>, i32 -> vector<8x256xf32>
    %124 = vector.broadcast %6 : f32 to vector<8x256xf32>
    %125 = arith.mulf %124, %123 : vector<8x256xf32>
    %126 = arith.addf %116, %125 : vector<8x256xf32>
    %127 = vector.broadcast %15 : f32 to vector<8x256xf32>
    %128 = arith.mulf %127, %123 : vector<8x256xf32>
    %129 = arith.addf %119, %128 : vector<8x256xf32>
    %130 = vector.broadcast %24 : f32 to vector<8x256xf32>
    %131 = arith.mulf %130, %123 : vector<8x256xf32>
    %132 = arith.addf %122, %131 : vector<8x256xf32>
    %c16_i32_10 = arith.constant 16 : i32
    %133 = tpu.dynamic_rotate %103 by %c16_i32_10 dim 1 : vector<8x256xf32>, i32 -> vector<8x256xf32>
    %134 = vector.broadcast %1 : f32 to vector<8x256xf32>
    %135 = arith.mulf %134, %133 : vector<8x256xf32>
    %136 = arith.addf %126, %135 : vector<8x256xf32>
    %137 = vector.broadcast %10 : f32 to vector<8x256xf32>
    %138 = arith.mulf %137, %133 : vector<8x256xf32>
    %139 = arith.addf %129, %138 : vector<8x256xf32>
    %140 = vector.broadcast %19 : f32 to vector<8x256xf32>
    %141 = arith.mulf %140, %133 : vector<8x256xf32>
    %142 = arith.addf %132, %141 : vector<8x256xf32>
    %143 = vector.broadcast %4 : f32 to vector<8x256xf32>
    %144 = arith.mulf %143, %103 : vector<8x256xf32>
    %145 = arith.addf %136, %144 : vector<8x256xf32>
    %146 = vector.broadcast %13 : f32 to vector<8x256xf32>
    %147 = arith.mulf %146, %103 : vector<8x256xf32>
    %148 = arith.addf %139, %147 : vector<8x256xf32>
    %149 = vector.broadcast %22 : f32 to vector<8x256xf32>
    %150 = arith.mulf %149, %103 : vector<8x256xf32>
    %151 = arith.addf %142, %150 : vector<8x256xf32>
    %c240_i32_11 = arith.constant 240 : i32
    %152 = tpu.dynamic_rotate %103 by %c240_i32_11 dim 1 : vector<8x256xf32>, i32 -> vector<8x256xf32>
    %153 = vector.broadcast %7 : f32 to vector<8x256xf32>
    %154 = arith.mulf %153, %152 : vector<8x256xf32>
    %155 = arith.addf %145, %154 : vector<8x256xf32>
    %156 = vector.broadcast %16 : f32 to vector<8x256xf32>
    %157 = arith.mulf %156, %152 : vector<8x256xf32>
    %158 = arith.addf %148, %157 : vector<8x256xf32>
    %159 = vector.broadcast %25 : f32 to vector<8x256xf32>
    %160 = arith.mulf %159, %152 : vector<8x256xf32>
    %161 = arith.addf %151, %160 : vector<8x256xf32>
    %c15_i32_12 = arith.constant 15 : i32
    %162 = tpu.dynamic_rotate %103 by %c15_i32_12 dim 1 : vector<8x256xf32>, i32 -> vector<8x256xf32>
    %c255_i32 = arith.constant 255 : i32
    %163 = tpu.dynamic_rotate %103 by %c255_i32 dim 1 : vector<8x256xf32>, i32 -> vector<8x256xf32>
    %164 = arith.select %101, %162, %163 : vector<8x256xi1>, vector<8x256xf32>
    %c16_i32_13 = arith.constant 16 : i32
    %165 = tpu.dynamic_rotate %164 by %c16_i32_13 dim 1 : vector<8x256xf32>, i32 -> vector<8x256xf32>
    %166 = vector.broadcast %2 : f32 to vector<8x256xf32>
    %167 = arith.mulf %166, %165 : vector<8x256xf32>
    %168 = arith.addf %155, %167 : vector<8x256xf32>
    %169 = vector.broadcast %11 : f32 to vector<8x256xf32>
    %170 = arith.mulf %169, %165 : vector<8x256xf32>
    %171 = arith.addf %158, %170 : vector<8x256xf32>
    %172 = vector.broadcast %20 : f32 to vector<8x256xf32>
    %173 = arith.mulf %172, %165 : vector<8x256xf32>
    %174 = arith.addf %161, %173 : vector<8x256xf32>
    %175 = vector.broadcast %5 : f32 to vector<8x256xf32>
    %176 = arith.mulf %175, %164 : vector<8x256xf32>
    %177 = arith.addf %168, %176 : vector<8x256xf32>
    %178 = vector.broadcast %14 : f32 to vector<8x256xf32>
    %179 = arith.mulf %178, %164 : vector<8x256xf32>
    %180 = arith.addf %171, %179 : vector<8x256xf32>
    %181 = vector.broadcast %23 : f32 to vector<8x256xf32>
    %182 = arith.mulf %181, %164 : vector<8x256xf32>
    %183 = arith.addf %174, %182 : vector<8x256xf32>
    %c240_i32_14 = arith.constant 240 : i32
    %184 = tpu.dynamic_rotate %164 by %c240_i32_14 dim 1 : vector<8x256xf32>, i32 -> vector<8x256xf32>
    %185 = vector.broadcast %8 : f32 to vector<8x256xf32>
    %186 = arith.mulf %185, %184 : vector<8x256xf32>
    %187 = arith.addf %177, %186 : vector<8x256xf32>
    %188 = vector.broadcast %17 : f32 to vector<8x256xf32>
    %189 = arith.mulf %188, %184 : vector<8x256xf32>
    %190 = arith.addf %180, %189 : vector<8x256xf32>
    %191 = vector.broadcast %26 : f32 to vector<8x256xf32>
    %192 = arith.mulf %191, %184 : vector<8x256xf32>
    %193 = arith.addf %183, %192 : vector<8x256xf32>
    %c0_15 = arith.constant 0 : index
    %c1_16 = arith.constant 1 : index
    %c0_17 = arith.constant 0 : index
    %c0_18 = arith.constant 0 : index
    %194 = vector.load %arg2[%c0_15, %c1_16, %c0_17, %c0_18] : memref<1x6x8x256xf32, #tpu.memory_space<vmem>>, vector<1x1x8x256xf32>
    %195 = vector.shape_cast %194 : vector<1x1x8x256xf32> to vector<8x256xf32>
    %c241_i32_19 = arith.constant 241 : i32
    %196 = tpu.dynamic_rotate %195 by %c241_i32_19 dim 1 : vector<8x256xf32>, i32 -> vector<8x256xf32>
    %c1_i32_20 = arith.constant 1 : i32
    %197 = tpu.dynamic_rotate %195 by %c1_i32_20 dim 1 : vector<8x256xf32>, i32 -> vector<8x256xf32>
    %198 = arith.select %99, %196, %197 : vector<8x256xi1>, vector<8x256xf32>
    %c16_i32_21 = arith.constant 16 : i32
    %199 = tpu.dynamic_rotate %198 by %c16_i32_21 dim 1 : vector<8x256xf32>, i32 -> vector<8x256xf32>
    %200 = vector.broadcast %27 : f32 to vector<8x256xf32>
    %201 = arith.mulf %200, %199 : vector<8x256xf32>
    %202 = arith.addf %187, %201 : vector<8x256xf32>
    %203 = vector.broadcast %36 : f32 to vector<8x256xf32>
    %204 = arith.mulf %203, %199 : vector<8x256xf32>
    %205 = arith.addf %190, %204 : vector<8x256xf32>
    %206 = vector.broadcast %45 : f32 to vector<8x256xf32>
    %207 = arith.mulf %206, %199 : vector<8x256xf32>
    %208 = arith.addf %193, %207 : vector<8x256xf32>
    %209 = vector.broadcast %0 : f32 to vector<8x256xf32>
    %210 = arith.mulf %209, %199 : vector<8x256xf32>
    %211 = vector.broadcast %9 : f32 to vector<8x256xf32>
    %212 = arith.mulf %211, %199 : vector<8x256xf32>
    %213 = vector.broadcast %18 : f32 to vector<8x256xf32>
    %214 = arith.mulf %213, %199 : vector<8x256xf32>
    %215 = vector.broadcast %30 : f32 to vector<8x256xf32>
    %216 = arith.mulf %215, %198 : vector<8x256xf32>
    %217 = arith.addf %202, %216 : vector<8x256xf32>
    %218 = vector.broadcast %39 : f32 to vector<8x256xf32>
    %219 = arith.mulf %218, %198 : vector<8x256xf32>
    %220 = arith.addf %205, %219 : vector<8x256xf32>
    %221 = vector.broadcast %48 : f32 to vector<8x256xf32>
    %222 = arith.mulf %221, %198 : vector<8x256xf32>
    %223 = arith.addf %208, %222 : vector<8x256xf32>
    %224 = vector.broadcast %3 : f32 to vector<8x256xf32>
    %225 = arith.mulf %224, %198 : vector<8x256xf32>
    %226 = arith.addf %210, %225 : vector<8x256xf32>
    %227 = vector.broadcast %12 : f32 to vector<8x256xf32>
    %228 = arith.mulf %227, %198 : vector<8x256xf32>
    %229 = arith.addf %212, %228 : vector<8x256xf32>
    %230 = vector.broadcast %21 : f32 to vector<8x256xf32>
    %231 = arith.mulf %230, %198 : vector<8x256xf32>
    %232 = arith.addf %214, %231 : vector<8x256xf32>
    %c240_i32_22 = arith.constant 240 : i32
    %233 = tpu.dynamic_rotate %198 by %c240_i32_22 dim 1 : vector<8x256xf32>, i32 -> vector<8x256xf32>
    %234 = vector.broadcast %33 : f32 to vector<8x256xf32>
    %235 = arith.mulf %234, %233 : vector<8x256xf32>
    %236 = arith.addf %217, %235 : vector<8x256xf32>
    %237 = vector.broadcast %42 : f32 to vector<8x256xf32>
    %238 = arith.mulf %237, %233 : vector<8x256xf32>
    %239 = arith.addf %220, %238 : vector<8x256xf32>
    %240 = vector.broadcast %51 : f32 to vector<8x256xf32>
    %241 = arith.mulf %240, %233 : vector<8x256xf32>
    %242 = arith.addf %223, %241 : vector<8x256xf32>
    %243 = vector.broadcast %6 : f32 to vector<8x256xf32>
    %244 = arith.mulf %243, %233 : vector<8x256xf32>
    %245 = arith.addf %226, %244 : vector<8x256xf32>
    %246 = vector.broadcast %15 : f32 to vector<8x256xf32>
    %247 = arith.mulf %246, %233 : vector<8x256xf32>
    %248 = arith.addf %229, %247 : vector<8x256xf32>
    %249 = vector.broadcast %24 : f32 to vector<8x256xf32>
    %250 = arith.mulf %249, %233 : vector<8x256xf32>
    %251 = arith.addf %232, %250 : vector<8x256xf32>
    %c16_i32_23 = arith.constant 16 : i32
    %252 = tpu.dynamic_rotate %195 by %c16_i32_23 dim 1 : vector<8x256xf32>, i32 -> vector<8x256xf32>
    %253 = vector.broadcast %28 : f32 to vector<8x256xf32>
    %254 = arith.mulf %253, %252 : vector<8x256xf32>
    %255 = arith.addf %236, %254 : vector<8x256xf32>
    %256 = vector.broadcast %37 : f32 to vector<8x256xf32>
    %257 = arith.mulf %256, %252 : vector<8x256xf32>
    %258 = arith.addf %239, %257 : vector<8x256xf32>
    %259 = vector.broadcast %46 : f32 to vector<8x256xf32>
    %260 = arith.mulf %259, %252 : vector<8x256xf32>
    %261 = arith.addf %242, %260 : vector<8x256xf32>
    %262 = vector.broadcast %1 : f32 to vector<8x256xf32>
    %263 = arith.mulf %262, %252 : vector<8x256xf32>
    %264 = arith.addf %245, %263 : vector<8x256xf32>
    %265 = vector.broadcast %10 : f32 to vector<8x256xf32>
    %266 = arith.mulf %265, %252 : vector<8x256xf32>
    %267 = arith.addf %248, %266 : vector<8x256xf32>
    %268 = vector.broadcast %19 : f32 to vector<8x256xf32>
    %269 = arith.mulf %268, %252 : vector<8x256xf32>
    %270 = arith.addf %251, %269 : vector<8x256xf32>
    %271 = vector.broadcast %31 : f32 to vector<8x256xf32>
    %272 = arith.mulf %271, %195 : vector<8x256xf32>
    %273 = arith.addf %255, %272 : vector<8x256xf32>
    %274 = vector.broadcast %40 : f32 to vector<8x256xf32>
    %275 = arith.mulf %274, %195 : vector<8x256xf32>
    %276 = arith.addf %258, %275 : vector<8x256xf32>
    %277 = vector.broadcast %49 : f32 to vector<8x256xf32>
    %278 = arith.mulf %277, %195 : vector<8x256xf32>
    %279 = arith.addf %261, %278 : vector<8x256xf32>
    %280 = vector.broadcast %4 : f32 to vector<8x256xf32>
    %281 = arith.mulf %280, %195 : vector<8x256xf32>
    %282 = arith.addf %264, %281 : vector<8x256xf32>
    %283 = vector.broadcast %13 : f32 to vector<8x256xf32>
    %284 = arith.mulf %283, %195 : vector<8x256xf32>
    %285 = arith.addf %267, %284 : vector<8x256xf32>
    %286 = vector.broadcast %22 : f32 to vector<8x256xf32>
    %287 = arith.mulf %286, %195 : vector<8x256xf32>
    %288 = arith.addf %270, %287 : vector<8x256xf32>
    %c240_i32_24 = arith.constant 240 : i32
    %289 = tpu.dynamic_rotate %195 by %c240_i32_24 dim 1 : vector<8x256xf32>, i32 -> vector<8x256xf32>
    %290 = vector.broadcast %34 : f32 to vector<8x256xf32>
    %291 = arith.mulf %290, %289 : vector<8x256xf32>
    %292 = arith.addf %273, %291 : vector<8x256xf32>
    %293 = vector.broadcast %43 : f32 to vector<8x256xf32>
    %294 = arith.mulf %293, %289 : vector<8x256xf32>
    %295 = arith.addf %276, %294 : vector<8x256xf32>
    %296 = vector.broadcast %52 : f32 to vector<8x256xf32>
    %297 = arith.mulf %296, %289 : vector<8x256xf32>
    %298 = arith.addf %279, %297 : vector<8x256xf32>
    %299 = vector.broadcast %7 : f32 to vector<8x256xf32>
    %300 = arith.mulf %299, %289 : vector<8x256xf32>
    %301 = arith.addf %282, %300 : vector<8x256xf32>
    %302 = vector.broadcast %16 : f32 to vector<8x256xf32>
    %303 = arith.mulf %302, %289 : vector<8x256xf32>
    %304 = arith.addf %285, %303 : vector<8x256xf32>
    %305 = vector.broadcast %25 : f32 to vector<8x256xf32>
    %306 = arith.mulf %305, %289 : vector<8x256xf32>
    %307 = arith.addf %288, %306 : vector<8x256xf32>
    %c15_i32_25 = arith.constant 15 : i32
    %308 = tpu.dynamic_rotate %195 by %c15_i32_25 dim 1 : vector<8x256xf32>, i32 -> vector<8x256xf32>
    %c255_i32_26 = arith.constant 255 : i32
    %309 = tpu.dynamic_rotate %195 by %c255_i32_26 dim 1 : vector<8x256xf32>, i32 -> vector<8x256xf32>
    %310 = arith.select %101, %308, %309 : vector<8x256xi1>, vector<8x256xf32>
    %c16_i32_27 = arith.constant 16 : i32
    %311 = tpu.dynamic_rotate %310 by %c16_i32_27 dim 1 : vector<8x256xf32>, i32 -> vector<8x256xf32>
    %312 = vector.broadcast %29 : f32 to vector<8x256xf32>
    %313 = arith.mulf %312, %311 : vector<8x256xf32>
    %314 = arith.addf %292, %313 : vector<8x256xf32>
    %315 = vector.broadcast %38 : f32 to vector<8x256xf32>
    %316 = arith.mulf %315, %311 : vector<8x256xf32>
    %317 = arith.addf %295, %316 : vector<8x256xf32>
    %318 = vector.broadcast %47 : f32 to vector<8x256xf32>
    %319 = arith.mulf %318, %311 : vector<8x256xf32>
    %320 = arith.addf %298, %319 : vector<8x256xf32>
    %321 = vector.broadcast %2 : f32 to vector<8x256xf32>
    %322 = arith.mulf %321, %311 : vector<8x256xf32>
    %323 = arith.addf %301, %322 : vector<8x256xf32>
    %324 = vector.broadcast %11 : f32 to vector<8x256xf32>
    %325 = arith.mulf %324, %311 : vector<8x256xf32>
    %326 = arith.addf %304, %325 : vector<8x256xf32>
    %327 = vector.broadcast %20 : f32 to vector<8x256xf32>
    %328 = arith.mulf %327, %311 : vector<8x256xf32>
    %329 = arith.addf %307, %328 : vector<8x256xf32>
    %330 = vector.broadcast %32 : f32 to vector<8x256xf32>
    %331 = arith.mulf %330, %310 : vector<8x256xf32>
    %332 = arith.addf %314, %331 : vector<8x256xf32>
    %333 = vector.broadcast %41 : f32 to vector<8x256xf32>
    %334 = arith.mulf %333, %310 : vector<8x256xf32>
    %335 = arith.addf %317, %334 : vector<8x256xf32>
    %336 = vector.broadcast %50 : f32 to vector<8x256xf32>
    %337 = arith.mulf %336, %310 : vector<8x256xf32>
    %338 = arith.addf %320, %337 : vector<8x256xf32>
    %339 = vector.broadcast %5 : f32 to vector<8x256xf32>
    %340 = arith.mulf %339, %310 : vector<8x256xf32>
    %341 = arith.addf %323, %340 : vector<8x256xf32>
    %342 = vector.broadcast %14 : f32 to vector<8x256xf32>
    %343 = arith.mulf %342, %310 : vector<8x256xf32>
    %344 = arith.addf %326, %343 : vector<8x256xf32>
    %345 = vector.broadcast %23 : f32 to vector<8x256xf32>
    %346 = arith.mulf %345, %310 : vector<8x256xf32>
    %347 = arith.addf %329, %346 : vector<8x256xf32>
    %c240_i32_28 = arith.constant 240 : i32
    %348 = tpu.dynamic_rotate %310 by %c240_i32_28 dim 1 : vector<8x256xf32>, i32 -> vector<8x256xf32>
    %349 = vector.broadcast %35 : f32 to vector<8x256xf32>
    %350 = arith.mulf %349, %348 : vector<8x256xf32>
    %351 = arith.addf %332, %350 : vector<8x256xf32>
    %352 = vector.broadcast %44 : f32 to vector<8x256xf32>
    %353 = arith.mulf %352, %348 : vector<8x256xf32>
    %354 = arith.addf %335, %353 : vector<8x256xf32>
    %355 = vector.broadcast %53 : f32 to vector<8x256xf32>
    %356 = arith.mulf %355, %348 : vector<8x256xf32>
    %357 = arith.addf %338, %356 : vector<8x256xf32>
    %358 = vector.broadcast %8 : f32 to vector<8x256xf32>
    %359 = arith.mulf %358, %348 : vector<8x256xf32>
    %360 = arith.addf %341, %359 : vector<8x256xf32>
    %361 = vector.broadcast %17 : f32 to vector<8x256xf32>
    %362 = arith.mulf %361, %348 : vector<8x256xf32>
    %363 = arith.addf %344, %362 : vector<8x256xf32>
    %364 = vector.broadcast %26 : f32 to vector<8x256xf32>
    %365 = arith.mulf %364, %348 : vector<8x256xf32>
    %366 = arith.addf %347, %365 : vector<8x256xf32>
    %c0_29 = arith.constant 0 : index
    %c2_30 = arith.constant 2 : index
    %c0_31 = arith.constant 0 : index
    %c0_32 = arith.constant 0 : index
    %367 = vector.load %arg2[%c0_29, %c2_30, %c0_31, %c0_32] : memref<1x6x8x256xf32, #tpu.memory_space<vmem>>, vector<1x1x8x256xf32>
    %368 = vector.shape_cast %367 : vector<1x1x8x256xf32> to vector<8x256xf32>
    %c241_i32_33 = arith.constant 241 : i32
    %369 = tpu.dynamic_rotate %368 by %c241_i32_33 dim 1 : vector<8x256xf32>, i32 -> vector<8x256xf32>
    %c1_i32_34 = arith.constant 1 : i32
    %370 = tpu.dynamic_rotate %368 by %c1_i32_34 dim 1 : vector<8x256xf32>, i32 -> vector<8x256xf32>
    %371 = arith.select %99, %369, %370 : vector<8x256xi1>, vector<8x256xf32>
    %c16_i32_35 = arith.constant 16 : i32
    %372 = tpu.dynamic_rotate %371 by %c16_i32_35 dim 1 : vector<8x256xf32>, i32 -> vector<8x256xf32>
    %373 = vector.broadcast %54 : f32 to vector<8x256xf32>
    %374 = arith.mulf %373, %372 : vector<8x256xf32>
    %375 = arith.addf %351, %374 : vector<8x256xf32>
    %376 = vector.broadcast %63 : f32 to vector<8x256xf32>
    %377 = arith.mulf %376, %372 : vector<8x256xf32>
    %378 = arith.addf %354, %377 : vector<8x256xf32>
    %379 = vector.broadcast %72 : f32 to vector<8x256xf32>
    %380 = arith.mulf %379, %372 : vector<8x256xf32>
    %381 = arith.addf %357, %380 : vector<8x256xf32>
    %382 = vector.broadcast %0 : f32 to vector<8x256xf32>
    %383 = arith.mulf %382, %372 : vector<8x256xf32>
    %384 = vector.broadcast %9 : f32 to vector<8x256xf32>
    %385 = arith.mulf %384, %372 : vector<8x256xf32>
    %386 = vector.broadcast %18 : f32 to vector<8x256xf32>
    %387 = arith.mulf %386, %372 : vector<8x256xf32>
    %388 = vector.broadcast %57 : f32 to vector<8x256xf32>
    %389 = arith.mulf %388, %371 : vector<8x256xf32>
    %390 = arith.addf %375, %389 : vector<8x256xf32>
    %391 = vector.broadcast %66 : f32 to vector<8x256xf32>
    %392 = arith.mulf %391, %371 : vector<8x256xf32>
    %393 = arith.addf %378, %392 : vector<8x256xf32>
    %394 = vector.broadcast %75 : f32 to vector<8x256xf32>
    %395 = arith.mulf %394, %371 : vector<8x256xf32>
    %396 = arith.addf %381, %395 : vector<8x256xf32>
    %397 = vector.broadcast %3 : f32 to vector<8x256xf32>
    %398 = arith.mulf %397, %371 : vector<8x256xf32>
    %399 = arith.addf %383, %398 : vector<8x256xf32>
    %400 = vector.broadcast %12 : f32 to vector<8x256xf32>
    %401 = arith.mulf %400, %371 : vector<8x256xf32>
    %402 = arith.addf %385, %401 : vector<8x256xf32>
    %403 = vector.broadcast %21 : f32 to vector<8x256xf32>
    %404 = arith.mulf %403, %371 : vector<8x256xf32>
    %405 = arith.addf %387, %404 : vector<8x256xf32>
    %c240_i32_36 = arith.constant 240 : i32
    %406 = tpu.dynamic_rotate %371 by %c240_i32_36 dim 1 : vector<8x256xf32>, i32 -> vector<8x256xf32>
    %407 = vector.broadcast %60 : f32 to vector<8x256xf32>
    %408 = arith.mulf %407, %406 : vector<8x256xf32>
    %409 = arith.addf %390, %408 : vector<8x256xf32>
    %410 = vector.broadcast %69 : f32 to vector<8x256xf32>
    %411 = arith.mulf %410, %406 : vector<8x256xf32>
    %412 = arith.addf %393, %411 : vector<8x256xf32>
    %413 = vector.broadcast %78 : f32 to vector<8x256xf32>
    %414 = arith.mulf %413, %406 : vector<8x256xf32>
    %415 = arith.addf %396, %414 : vector<8x256xf32>
    %416 = vector.broadcast %6 : f32 to vector<8x256xf32>
    %417 = arith.mulf %416, %406 : vector<8x256xf32>
    %418 = arith.addf %399, %417 : vector<8x256xf32>
    %419 = vector.broadcast %15 : f32 to vector<8x256xf32>
    %420 = arith.mulf %419, %406 : vector<8x256xf32>
    %421 = arith.addf %402, %420 : vector<8x256xf32>
    %422 = vector.broadcast %24 : f32 to vector<8x256xf32>
    %423 = arith.mulf %422, %406 : vector<8x256xf32>
    %424 = arith.addf %405, %423 : vector<8x256xf32>
    %c16_i32_37 = arith.constant 16 : i32
    %425 = tpu.dynamic_rotate %368 by %c16_i32_37 dim 1 : vector<8x256xf32>, i32 -> vector<8x256xf32>
    %426 = vector.broadcast %55 : f32 to vector<8x256xf32>
    %427 = arith.mulf %426, %425 : vector<8x256xf32>
    %428 = arith.addf %409, %427 : vector<8x256xf32>
    %429 = vector.broadcast %64 : f32 to vector<8x256xf32>
    %430 = arith.mulf %429, %425 : vector<8x256xf32>
    %431 = arith.addf %412, %430 : vector<8x256xf32>
    %432 = vector.broadcast %73 : f32 to vector<8x256xf32>
    %433 = arith.mulf %432, %425 : vector<8x256xf32>
    %434 = arith.addf %415, %433 : vector<8x256xf32>
    %435 = vector.broadcast %1 : f32 to vector<8x256xf32>
    %436 = arith.mulf %435, %425 : vector<8x256xf32>
    %437 = arith.addf %418, %436 : vector<8x256xf32>
    %438 = vector.broadcast %10 : f32 to vector<8x256xf32>
    %439 = arith.mulf %438, %425 : vector<8x256xf32>
    %440 = arith.addf %421, %439 : vector<8x256xf32>
    %441 = vector.broadcast %19 : f32 to vector<8x256xf32>
    %442 = arith.mulf %441, %425 : vector<8x256xf32>
    %443 = arith.addf %424, %442 : vector<8x256xf32>
    %444 = vector.broadcast %58 : f32 to vector<8x256xf32>
    %445 = arith.mulf %444, %368 : vector<8x256xf32>
    %446 = arith.addf %428, %445 : vector<8x256xf32>
    %447 = vector.broadcast %67 : f32 to vector<8x256xf32>
    %448 = arith.mulf %447, %368 : vector<8x256xf32>
    %449 = arith.addf %431, %448 : vector<8x256xf32>
    %450 = vector.broadcast %76 : f32 to vector<8x256xf32>
    %451 = arith.mulf %450, %368 : vector<8x256xf32>
    %452 = arith.addf %434, %451 : vector<8x256xf32>
    %453 = vector.broadcast %4 : f32 to vector<8x256xf32>
    %454 = arith.mulf %453, %368 : vector<8x256xf32>
    %455 = arith.addf %437, %454 : vector<8x256xf32>
    %456 = vector.broadcast %13 : f32 to vector<8x256xf32>
    %457 = arith.mulf %456, %368 : vector<8x256xf32>
    %458 = arith.addf %440, %457 : vector<8x256xf32>
    %459 = vector.broadcast %22 : f32 to vector<8x256xf32>
    %460 = arith.mulf %459, %368 : vector<8x256xf32>
    %461 = arith.addf %443, %460 : vector<8x256xf32>
    %c240_i32_38 = arith.constant 240 : i32
    %462 = tpu.dynamic_rotate %368 by %c240_i32_38 dim 1 : vector<8x256xf32>, i32 -> vector<8x256xf32>
    %463 = vector.broadcast %61 : f32 to vector<8x256xf32>
    %464 = arith.mulf %463, %462 : vector<8x256xf32>
    %465 = arith.addf %446, %464 : vector<8x256xf32>
    %466 = vector.broadcast %70 : f32 to vector<8x256xf32>
    %467 = arith.mulf %466, %462 : vector<8x256xf32>
    %468 = arith.addf %449, %467 : vector<8x256xf32>
    %469 = vector.broadcast %79 : f32 to vector<8x256xf32>
    %470 = arith.mulf %469, %462 : vector<8x256xf32>
    %471 = arith.addf %452, %470 : vector<8x256xf32>
    %472 = vector.broadcast %7 : f32 to vector<8x256xf32>
    %473 = arith.mulf %472, %462 : vector<8x256xf32>
    %474 = arith.addf %455, %473 : vector<8x256xf32>
    %475 = vector.broadcast %16 : f32 to vector<8x256xf32>
    %476 = arith.mulf %475, %462 : vector<8x256xf32>
    %477 = arith.addf %458, %476 : vector<8x256xf32>
    %478 = vector.broadcast %25 : f32 to vector<8x256xf32>
    %479 = arith.mulf %478, %462 : vector<8x256xf32>
    %480 = arith.addf %461, %479 : vector<8x256xf32>
    %c15_i32_39 = arith.constant 15 : i32
    %481 = tpu.dynamic_rotate %368 by %c15_i32_39 dim 1 : vector<8x256xf32>, i32 -> vector<8x256xf32>
    %c255_i32_40 = arith.constant 255 : i32
    %482 = tpu.dynamic_rotate %368 by %c255_i32_40 dim 1 : vector<8x256xf32>, i32 -> vector<8x256xf32>
    %483 = arith.select %101, %481, %482 : vector<8x256xi1>, vector<8x256xf32>
    %c16_i32_41 = arith.constant 16 : i32
    %484 = tpu.dynamic_rotate %483 by %c16_i32_41 dim 1 : vector<8x256xf32>, i32 -> vector<8x256xf32>
    %485 = vector.broadcast %56 : f32 to vector<8x256xf32>
    %486 = arith.mulf %485, %484 : vector<8x256xf32>
    %487 = arith.addf %465, %486 : vector<8x256xf32>
    %488 = vector.broadcast %65 : f32 to vector<8x256xf32>
    %489 = arith.mulf %488, %484 : vector<8x256xf32>
    %490 = arith.addf %468, %489 : vector<8x256xf32>
    %491 = vector.broadcast %74 : f32 to vector<8x256xf32>
    %492 = arith.mulf %491, %484 : vector<8x256xf32>
    %493 = arith.addf %471, %492 : vector<8x256xf32>
    %494 = vector.broadcast %2 : f32 to vector<8x256xf32>
    %495 = arith.mulf %494, %484 : vector<8x256xf32>
    %496 = arith.addf %474, %495 : vector<8x256xf32>
    %497 = vector.broadcast %11 : f32 to vector<8x256xf32>
    %498 = arith.mulf %497, %484 : vector<8x256xf32>
    %499 = arith.addf %477, %498 : vector<8x256xf32>
    %500 = vector.broadcast %20 : f32 to vector<8x256xf32>
    %501 = arith.mulf %500, %484 : vector<8x256xf32>
    %502 = arith.addf %480, %501 : vector<8x256xf32>
    %503 = vector.broadcast %59 : f32 to vector<8x256xf32>
    %504 = arith.mulf %503, %483 : vector<8x256xf32>
    %505 = arith.addf %487, %504 : vector<8x256xf32>
    %506 = vector.broadcast %68 : f32 to vector<8x256xf32>
    %507 = arith.mulf %506, %483 : vector<8x256xf32>
    %508 = arith.addf %490, %507 : vector<8x256xf32>
    %509 = vector.broadcast %77 : f32 to vector<8x256xf32>
    %510 = arith.mulf %509, %483 : vector<8x256xf32>
    %511 = arith.addf %493, %510 : vector<8x256xf32>
    %512 = vector.broadcast %5 : f32 to vector<8x256xf32>
    %513 = arith.mulf %512, %483 : vector<8x256xf32>
    %514 = arith.addf %496, %513 : vector<8x256xf32>
    %515 = vector.broadcast %14 : f32 to vector<8x256xf32>
    %516 = arith.mulf %515, %483 : vector<8x256xf32>
    %517 = arith.addf %499, %516 : vector<8x256xf32>
    %518 = vector.broadcast %23 : f32 to vector<8x256xf32>
    %519 = arith.mulf %518, %483 : vector<8x256xf32>
    %520 = arith.addf %502, %519 : vector<8x256xf32>
    %c240_i32_42 = arith.constant 240 : i32
    %521 = tpu.dynamic_rotate %483 by %c240_i32_42 dim 1 : vector<8x256xf32>, i32 -> vector<8x256xf32>
    %522 = vector.broadcast %62 : f32 to vector<8x256xf32>
    %523 = arith.mulf %522, %521 : vector<8x256xf32>
    %524 = arith.addf %505, %523 : vector<8x256xf32>
    %525 = vector.broadcast %71 : f32 to vector<8x256xf32>
    %526 = arith.mulf %525, %521 : vector<8x256xf32>
    %527 = arith.addf %508, %526 : vector<8x256xf32>
    %528 = vector.broadcast %80 : f32 to vector<8x256xf32>
    %529 = arith.mulf %528, %521 : vector<8x256xf32>
    %530 = arith.addf %511, %529 : vector<8x256xf32>
    %531 = vector.broadcast %8 : f32 to vector<8x256xf32>
    %532 = arith.mulf %531, %521 : vector<8x256xf32>
    %533 = arith.addf %514, %532 : vector<8x256xf32>
    %534 = vector.broadcast %17 : f32 to vector<8x256xf32>
    %535 = arith.mulf %534, %521 : vector<8x256xf32>
    %536 = arith.addf %517, %535 : vector<8x256xf32>
    %537 = vector.broadcast %26 : f32 to vector<8x256xf32>
    %538 = arith.mulf %537, %521 : vector<8x256xf32>
    %539 = arith.addf %520, %538 : vector<8x256xf32>
    %c0_43 = arith.constant 0 : index
    %c3_44 = arith.constant 3 : index
    %c0_45 = arith.constant 0 : index
    %c0_46 = arith.constant 0 : index
    %540 = vector.load %arg2[%c0_43, %c3_44, %c0_45, %c0_46] : memref<1x6x8x256xf32, #tpu.memory_space<vmem>>, vector<1x1x8x256xf32>
    %541 = vector.shape_cast %540 : vector<1x1x8x256xf32> to vector<8x256xf32>
    %c241_i32_47 = arith.constant 241 : i32
    %542 = tpu.dynamic_rotate %541 by %c241_i32_47 dim 1 : vector<8x256xf32>, i32 -> vector<8x256xf32>
    %c1_i32_48 = arith.constant 1 : i32
    %543 = tpu.dynamic_rotate %541 by %c1_i32_48 dim 1 : vector<8x256xf32>, i32 -> vector<8x256xf32>
    %544 = arith.select %99, %542, %543 : vector<8x256xi1>, vector<8x256xf32>
    %c16_i32_49 = arith.constant 16 : i32
    %545 = tpu.dynamic_rotate %544 by %c16_i32_49 dim 1 : vector<8x256xf32>, i32 -> vector<8x256xf32>
    %546 = vector.broadcast %27 : f32 to vector<8x256xf32>
    %547 = arith.mulf %546, %545 : vector<8x256xf32>
    %548 = arith.addf %360, %547 : vector<8x256xf32>
    %549 = vector.broadcast %36 : f32 to vector<8x256xf32>
    %550 = arith.mulf %549, %545 : vector<8x256xf32>
    %551 = arith.addf %363, %550 : vector<8x256xf32>
    %552 = vector.broadcast %45 : f32 to vector<8x256xf32>
    %553 = arith.mulf %552, %545 : vector<8x256xf32>
    %554 = arith.addf %366, %553 : vector<8x256xf32>
    %555 = vector.broadcast %30 : f32 to vector<8x256xf32>
    %556 = arith.mulf %555, %544 : vector<8x256xf32>
    %557 = arith.addf %548, %556 : vector<8x256xf32>
    %558 = vector.broadcast %39 : f32 to vector<8x256xf32>
    %559 = arith.mulf %558, %544 : vector<8x256xf32>
    %560 = arith.addf %551, %559 : vector<8x256xf32>
    %561 = vector.broadcast %48 : f32 to vector<8x256xf32>
    %562 = arith.mulf %561, %544 : vector<8x256xf32>
    %563 = arith.addf %554, %562 : vector<8x256xf32>
    %c240_i32_50 = arith.constant 240 : i32
    %564 = tpu.dynamic_rotate %544 by %c240_i32_50 dim 1 : vector<8x256xf32>, i32 -> vector<8x256xf32>
    %565 = vector.broadcast %33 : f32 to vector<8x256xf32>
    %566 = arith.mulf %565, %564 : vector<8x256xf32>
    %567 = arith.addf %557, %566 : vector<8x256xf32>
    %568 = vector.broadcast %42 : f32 to vector<8x256xf32>
    %569 = arith.mulf %568, %564 : vector<8x256xf32>
    %570 = arith.addf %560, %569 : vector<8x256xf32>
    %571 = vector.broadcast %51 : f32 to vector<8x256xf32>
    %572 = arith.mulf %571, %564 : vector<8x256xf32>
    %573 = arith.addf %563, %572 : vector<8x256xf32>
    %c16_i32_51 = arith.constant 16 : i32
    %574 = tpu.dynamic_rotate %541 by %c16_i32_51 dim 1 : vector<8x256xf32>, i32 -> vector<8x256xf32>
    %575 = vector.broadcast %28 : f32 to vector<8x256xf32>
    %576 = arith.mulf %575, %574 : vector<8x256xf32>
    %577 = arith.addf %567, %576 : vector<8x256xf32>
    %578 = vector.broadcast %37 : f32 to vector<8x256xf32>
    %579 = arith.mulf %578, %574 : vector<8x256xf32>
    %580 = arith.addf %570, %579 : vector<8x256xf32>
    %581 = vector.broadcast %46 : f32 to vector<8x256xf32>
    %582 = arith.mulf %581, %574 : vector<8x256xf32>
    %583 = arith.addf %573, %582 : vector<8x256xf32>
    %584 = vector.broadcast %31 : f32 to vector<8x256xf32>
    %585 = arith.mulf %584, %541 : vector<8x256xf32>
    %586 = arith.addf %577, %585 : vector<8x256xf32>
    %587 = vector.broadcast %40 : f32 to vector<8x256xf32>
    %588 = arith.mulf %587, %541 : vector<8x256xf32>
    %589 = arith.addf %580, %588 : vector<8x256xf32>
    %590 = vector.broadcast %49 : f32 to vector<8x256xf32>
    %591 = arith.mulf %590, %541 : vector<8x256xf32>
    %592 = arith.addf %583, %591 : vector<8x256xf32>
    %c240_i32_52 = arith.constant 240 : i32
    %593 = tpu.dynamic_rotate %541 by %c240_i32_52 dim 1 : vector<8x256xf32>, i32 -> vector<8x256xf32>
    %594 = vector.broadcast %34 : f32 to vector<8x256xf32>
    %595 = arith.mulf %594, %593 : vector<8x256xf32>
    %596 = arith.addf %586, %595 : vector<8x256xf32>
    %597 = vector.broadcast %43 : f32 to vector<8x256xf32>
    %598 = arith.mulf %597, %593 : vector<8x256xf32>
    %599 = arith.addf %589, %598 : vector<8x256xf32>
    %600 = vector.broadcast %52 : f32 to vector<8x256xf32>
    %601 = arith.mulf %600, %593 : vector<8x256xf32>
    %602 = arith.addf %592, %601 : vector<8x256xf32>
    %c15_i32_53 = arith.constant 15 : i32
    %603 = tpu.dynamic_rotate %541 by %c15_i32_53 dim 1 : vector<8x256xf32>, i32 -> vector<8x256xf32>
    %c255_i32_54 = arith.constant 255 : i32
    %604 = tpu.dynamic_rotate %541 by %c255_i32_54 dim 1 : vector<8x256xf32>, i32 -> vector<8x256xf32>
    %605 = arith.select %101, %603, %604 : vector<8x256xi1>, vector<8x256xf32>
    %c16_i32_55 = arith.constant 16 : i32
    %606 = tpu.dynamic_rotate %605 by %c16_i32_55 dim 1 : vector<8x256xf32>, i32 -> vector<8x256xf32>
    %607 = vector.broadcast %29 : f32 to vector<8x256xf32>
    %608 = arith.mulf %607, %606 : vector<8x256xf32>
    %609 = arith.addf %596, %608 : vector<8x256xf32>
    %610 = vector.broadcast %38 : f32 to vector<8x256xf32>
    %611 = arith.mulf %610, %606 : vector<8x256xf32>
    %612 = arith.addf %599, %611 : vector<8x256xf32>
    %613 = vector.broadcast %47 : f32 to vector<8x256xf32>
    %614 = arith.mulf %613, %606 : vector<8x256xf32>
    %615 = arith.addf %602, %614 : vector<8x256xf32>
    %616 = vector.broadcast %32 : f32 to vector<8x256xf32>
    %617 = arith.mulf %616, %605 : vector<8x256xf32>
    %618 = arith.addf %609, %617 : vector<8x256xf32>
    %619 = vector.broadcast %41 : f32 to vector<8x256xf32>
    %620 = arith.mulf %619, %605 : vector<8x256xf32>
    %621 = arith.addf %612, %620 : vector<8x256xf32>
    %622 = vector.broadcast %50 : f32 to vector<8x256xf32>
    %623 = arith.mulf %622, %605 : vector<8x256xf32>
    %624 = arith.addf %615, %623 : vector<8x256xf32>
    %c240_i32_56 = arith.constant 240 : i32
    %625 = tpu.dynamic_rotate %605 by %c240_i32_56 dim 1 : vector<8x256xf32>, i32 -> vector<8x256xf32>
    %626 = vector.broadcast %35 : f32 to vector<8x256xf32>
    %627 = arith.mulf %626, %625 : vector<8x256xf32>
    %628 = arith.addf %618, %627 : vector<8x256xf32>
    %629 = vector.broadcast %44 : f32 to vector<8x256xf32>
    %630 = arith.mulf %629, %625 : vector<8x256xf32>
    %631 = arith.addf %621, %630 : vector<8x256xf32>
    %632 = vector.broadcast %53 : f32 to vector<8x256xf32>
    %633 = arith.mulf %632, %625 : vector<8x256xf32>
    %634 = arith.addf %624, %633 : vector<8x256xf32>
    %c0_57 = arith.constant 0 : index
    %c4_58 = arith.constant 4 : index
    %c0_59 = arith.constant 0 : index
    %c0_60 = arith.constant 0 : index
    %635 = vector.load %arg2[%c0_57, %c4_58, %c0_59, %c0_60] : memref<1x6x8x256xf32, #tpu.memory_space<vmem>>, vector<1x1x8x256xf32>
    %636 = vector.shape_cast %635 : vector<1x1x8x256xf32> to vector<8x256xf32>
    %c241_i32_61 = arith.constant 241 : i32
    %637 = tpu.dynamic_rotate %636 by %c241_i32_61 dim 1 : vector<8x256xf32>, i32 -> vector<8x256xf32>
    %c1_i32_62 = arith.constant 1 : i32
    %638 = tpu.dynamic_rotate %636 by %c1_i32_62 dim 1 : vector<8x256xf32>, i32 -> vector<8x256xf32>
    %639 = arith.select %99, %637, %638 : vector<8x256xi1>, vector<8x256xf32>
    %c16_i32_63 = arith.constant 16 : i32
    %640 = tpu.dynamic_rotate %639 by %c16_i32_63 dim 1 : vector<8x256xf32>, i32 -> vector<8x256xf32>
    %641 = vector.broadcast %54 : f32 to vector<8x256xf32>
    %642 = arith.mulf %641, %640 : vector<8x256xf32>
    %643 = arith.addf %628, %642 : vector<8x256xf32>
    %644 = vector.broadcast %63 : f32 to vector<8x256xf32>
    %645 = arith.mulf %644, %640 : vector<8x256xf32>
    %646 = arith.addf %631, %645 : vector<8x256xf32>
    %647 = vector.broadcast %72 : f32 to vector<8x256xf32>
    %648 = arith.mulf %647, %640 : vector<8x256xf32>
    %649 = arith.addf %634, %648 : vector<8x256xf32>
    %650 = vector.broadcast %27 : f32 to vector<8x256xf32>
    %651 = arith.mulf %650, %640 : vector<8x256xf32>
    %652 = arith.addf %533, %651 : vector<8x256xf32>
    %653 = vector.broadcast %36 : f32 to vector<8x256xf32>
    %654 = arith.mulf %653, %640 : vector<8x256xf32>
    %655 = arith.addf %536, %654 : vector<8x256xf32>
    %656 = vector.broadcast %45 : f32 to vector<8x256xf32>
    %657 = arith.mulf %656, %640 : vector<8x256xf32>
    %658 = arith.addf %539, %657 : vector<8x256xf32>
    %659 = vector.broadcast %57 : f32 to vector<8x256xf32>
    %660 = arith.mulf %659, %639 : vector<8x256xf32>
    %661 = arith.addf %643, %660 : vector<8x256xf32>
    %662 = vector.broadcast %66 : f32 to vector<8x256xf32>
    %663 = arith.mulf %662, %639 : vector<8x256xf32>
    %664 = arith.addf %646, %663 : vector<8x256xf32>
    %665 = vector.broadcast %75 : f32 to vector<8x256xf32>
    %666 = arith.mulf %665, %639 : vector<8x256xf32>
    %667 = arith.addf %649, %666 : vector<8x256xf32>
    %668 = vector.broadcast %30 : f32 to vector<8x256xf32>
    %669 = arith.mulf %668, %639 : vector<8x256xf32>
    %670 = arith.addf %652, %669 : vector<8x256xf32>
    %671 = vector.broadcast %39 : f32 to vector<8x256xf32>
    %672 = arith.mulf %671, %639 : vector<8x256xf32>
    %673 = arith.addf %655, %672 : vector<8x256xf32>
    %674 = vector.broadcast %48 : f32 to vector<8x256xf32>
    %675 = arith.mulf %674, %639 : vector<8x256xf32>
    %676 = arith.addf %658, %675 : vector<8x256xf32>
    %c240_i32_64 = arith.constant 240 : i32
    %677 = tpu.dynamic_rotate %639 by %c240_i32_64 dim 1 : vector<8x256xf32>, i32 -> vector<8x256xf32>
    %678 = vector.broadcast %60 : f32 to vector<8x256xf32>
    %679 = arith.mulf %678, %677 : vector<8x256xf32>
    %680 = arith.addf %661, %679 : vector<8x256xf32>
    %681 = vector.broadcast %69 : f32 to vector<8x256xf32>
    %682 = arith.mulf %681, %677 : vector<8x256xf32>
    %683 = arith.addf %664, %682 : vector<8x256xf32>
    %684 = vector.broadcast %78 : f32 to vector<8x256xf32>
    %685 = arith.mulf %684, %677 : vector<8x256xf32>
    %686 = arith.addf %667, %685 : vector<8x256xf32>
    %687 = vector.broadcast %33 : f32 to vector<8x256xf32>
    %688 = arith.mulf %687, %677 : vector<8x256xf32>
    %689 = arith.addf %670, %688 : vector<8x256xf32>
    %690 = vector.broadcast %42 : f32 to vector<8x256xf32>
    %691 = arith.mulf %690, %677 : vector<8x256xf32>
    %692 = arith.addf %673, %691 : vector<8x256xf32>
    %693 = vector.broadcast %51 : f32 to vector<8x256xf32>
    %694 = arith.mulf %693, %677 : vector<8x256xf32>
    %695 = arith.addf %676, %694 : vector<8x256xf32>
    %c16_i32_65 = arith.constant 16 : i32
    %696 = tpu.dynamic_rotate %636 by %c16_i32_65 dim 1 : vector<8x256xf32>, i32 -> vector<8x256xf32>
    %697 = vector.broadcast %55 : f32 to vector<8x256xf32>
    %698 = arith.mulf %697, %696 : vector<8x256xf32>
    %699 = arith.addf %680, %698 : vector<8x256xf32>
    %700 = vector.broadcast %64 : f32 to vector<8x256xf32>
    %701 = arith.mulf %700, %696 : vector<8x256xf32>
    %702 = arith.addf %683, %701 : vector<8x256xf32>
    %703 = vector.broadcast %73 : f32 to vector<8x256xf32>
    %704 = arith.mulf %703, %696 : vector<8x256xf32>
    %705 = arith.addf %686, %704 : vector<8x256xf32>
    %706 = vector.broadcast %28 : f32 to vector<8x256xf32>
    %707 = arith.mulf %706, %696 : vector<8x256xf32>
    %708 = arith.addf %689, %707 : vector<8x256xf32>
    %709 = vector.broadcast %37 : f32 to vector<8x256xf32>
    %710 = arith.mulf %709, %696 : vector<8x256xf32>
    %711 = arith.addf %692, %710 : vector<8x256xf32>
    %712 = vector.broadcast %46 : f32 to vector<8x256xf32>
    %713 = arith.mulf %712, %696 : vector<8x256xf32>
    %714 = arith.addf %695, %713 : vector<8x256xf32>
    %715 = vector.broadcast %58 : f32 to vector<8x256xf32>
    %716 = arith.mulf %715, %636 : vector<8x256xf32>
    %717 = arith.addf %699, %716 : vector<8x256xf32>
    %718 = vector.broadcast %67 : f32 to vector<8x256xf32>
    %719 = arith.mulf %718, %636 : vector<8x256xf32>
    %720 = arith.addf %702, %719 : vector<8x256xf32>
    %721 = vector.broadcast %76 : f32 to vector<8x256xf32>
    %722 = arith.mulf %721, %636 : vector<8x256xf32>
    %723 = arith.addf %705, %722 : vector<8x256xf32>
    %724 = vector.broadcast %31 : f32 to vector<8x256xf32>
    %725 = arith.mulf %724, %636 : vector<8x256xf32>
    %726 = arith.addf %708, %725 : vector<8x256xf32>
    %727 = vector.broadcast %40 : f32 to vector<8x256xf32>
    %728 = arith.mulf %727, %636 : vector<8x256xf32>
    %729 = arith.addf %711, %728 : vector<8x256xf32>
    %730 = vector.broadcast %49 : f32 to vector<8x256xf32>
    %731 = arith.mulf %730, %636 : vector<8x256xf32>
    %732 = arith.addf %714, %731 : vector<8x256xf32>
    %c240_i32_66 = arith.constant 240 : i32
    %733 = tpu.dynamic_rotate %636 by %c240_i32_66 dim 1 : vector<8x256xf32>, i32 -> vector<8x256xf32>
    %734 = vector.broadcast %61 : f32 to vector<8x256xf32>
    %735 = arith.mulf %734, %733 : vector<8x256xf32>
    %736 = arith.addf %717, %735 : vector<8x256xf32>
    %737 = vector.broadcast %70 : f32 to vector<8x256xf32>
    %738 = arith.mulf %737, %733 : vector<8x256xf32>
    %739 = arith.addf %720, %738 : vector<8x256xf32>
    %740 = vector.broadcast %79 : f32 to vector<8x256xf32>
    %741 = arith.mulf %740, %733 : vector<8x256xf32>
    %742 = arith.addf %723, %741 : vector<8x256xf32>
    %743 = vector.broadcast %34 : f32 to vector<8x256xf32>
    %744 = arith.mulf %743, %733 : vector<8x256xf32>
    %745 = arith.addf %726, %744 : vector<8x256xf32>
    %746 = vector.broadcast %43 : f32 to vector<8x256xf32>
    %747 = arith.mulf %746, %733 : vector<8x256xf32>
    %748 = arith.addf %729, %747 : vector<8x256xf32>
    %749 = vector.broadcast %52 : f32 to vector<8x256xf32>
    %750 = arith.mulf %749, %733 : vector<8x256xf32>
    %751 = arith.addf %732, %750 : vector<8x256xf32>
    %c15_i32_67 = arith.constant 15 : i32
    %752 = tpu.dynamic_rotate %636 by %c15_i32_67 dim 1 : vector<8x256xf32>, i32 -> vector<8x256xf32>
    %c255_i32_68 = arith.constant 255 : i32
    %753 = tpu.dynamic_rotate %636 by %c255_i32_68 dim 1 : vector<8x256xf32>, i32 -> vector<8x256xf32>
    %754 = arith.select %101, %752, %753 : vector<8x256xi1>, vector<8x256xf32>
    %c16_i32_69 = arith.constant 16 : i32
    %755 = tpu.dynamic_rotate %754 by %c16_i32_69 dim 1 : vector<8x256xf32>, i32 -> vector<8x256xf32>
    %756 = vector.broadcast %56 : f32 to vector<8x256xf32>
    %757 = arith.mulf %756, %755 : vector<8x256xf32>
    %758 = arith.addf %736, %757 : vector<8x256xf32>
    %759 = vector.broadcast %65 : f32 to vector<8x256xf32>
    %760 = arith.mulf %759, %755 : vector<8x256xf32>
    %761 = arith.addf %739, %760 : vector<8x256xf32>
    %762 = vector.broadcast %74 : f32 to vector<8x256xf32>
    %763 = arith.mulf %762, %755 : vector<8x256xf32>
    %764 = arith.addf %742, %763 : vector<8x256xf32>
    %765 = vector.broadcast %29 : f32 to vector<8x256xf32>
    %766 = arith.mulf %765, %755 : vector<8x256xf32>
    %767 = arith.addf %745, %766 : vector<8x256xf32>
    %768 = vector.broadcast %38 : f32 to vector<8x256xf32>
    %769 = arith.mulf %768, %755 : vector<8x256xf32>
    %770 = arith.addf %748, %769 : vector<8x256xf32>
    %771 = vector.broadcast %47 : f32 to vector<8x256xf32>
    %772 = arith.mulf %771, %755 : vector<8x256xf32>
    %773 = arith.addf %751, %772 : vector<8x256xf32>
    %774 = vector.broadcast %59 : f32 to vector<8x256xf32>
    %775 = arith.mulf %774, %754 : vector<8x256xf32>
    %776 = arith.addf %758, %775 : vector<8x256xf32>
    %777 = vector.broadcast %68 : f32 to vector<8x256xf32>
    %778 = arith.mulf %777, %754 : vector<8x256xf32>
    %779 = arith.addf %761, %778 : vector<8x256xf32>
    %780 = vector.broadcast %77 : f32 to vector<8x256xf32>
    %781 = arith.mulf %780, %754 : vector<8x256xf32>
    %782 = arith.addf %764, %781 : vector<8x256xf32>
    %783 = vector.broadcast %32 : f32 to vector<8x256xf32>
    %784 = arith.mulf %783, %754 : vector<8x256xf32>
    %785 = arith.addf %767, %784 : vector<8x256xf32>
    %786 = vector.broadcast %41 : f32 to vector<8x256xf32>
    %787 = arith.mulf %786, %754 : vector<8x256xf32>
    %788 = arith.addf %770, %787 : vector<8x256xf32>
    %789 = vector.broadcast %50 : f32 to vector<8x256xf32>
    %790 = arith.mulf %789, %754 : vector<8x256xf32>
    %791 = arith.addf %773, %790 : vector<8x256xf32>
    %c240_i32_70 = arith.constant 240 : i32
    %792 = tpu.dynamic_rotate %754 by %c240_i32_70 dim 1 : vector<8x256xf32>, i32 -> vector<8x256xf32>
    %793 = vector.broadcast %62 : f32 to vector<8x256xf32>
    %794 = arith.mulf %793, %792 : vector<8x256xf32>
    %795 = arith.addf %776, %794 : vector<8x256xf32>
    %796 = vector.broadcast %71 : f32 to vector<8x256xf32>
    %797 = arith.mulf %796, %792 : vector<8x256xf32>
    %798 = arith.addf %779, %797 : vector<8x256xf32>
    %799 = vector.broadcast %80 : f32 to vector<8x256xf32>
    %800 = arith.mulf %799, %792 : vector<8x256xf32>
    %801 = arith.addf %782, %800 : vector<8x256xf32>
    %802 = vector.broadcast %35 : f32 to vector<8x256xf32>
    %803 = arith.mulf %802, %792 : vector<8x256xf32>
    %804 = arith.addf %785, %803 : vector<8x256xf32>
    %805 = vector.broadcast %44 : f32 to vector<8x256xf32>
    %806 = arith.mulf %805, %792 : vector<8x256xf32>
    %807 = arith.addf %788, %806 : vector<8x256xf32>
    %808 = vector.broadcast %53 : f32 to vector<8x256xf32>
    %809 = arith.mulf %808, %792 : vector<8x256xf32>
    %810 = arith.addf %791, %809 : vector<8x256xf32>
    %c0_71 = arith.constant 0 : index
    %c5_72 = arith.constant 5 : index
    %c0_73 = arith.constant 0 : index
    %c0_74 = arith.constant 0 : index
    %811 = vector.load %arg2[%c0_71, %c5_72, %c0_73, %c0_74] : memref<1x6x8x256xf32, #tpu.memory_space<vmem>>, vector<1x1x8x256xf32>
    %812 = vector.shape_cast %811 : vector<1x1x8x256xf32> to vector<8x256xf32>
    %c241_i32_75 = arith.constant 241 : i32
    %813 = tpu.dynamic_rotate %812 by %c241_i32_75 dim 1 : vector<8x256xf32>, i32 -> vector<8x256xf32>
    %c1_i32_76 = arith.constant 1 : i32
    %814 = tpu.dynamic_rotate %812 by %c1_i32_76 dim 1 : vector<8x256xf32>, i32 -> vector<8x256xf32>
    %815 = arith.select %99, %813, %814 : vector<8x256xi1>, vector<8x256xf32>
    %c16_i32_77 = arith.constant 16 : i32
    %816 = tpu.dynamic_rotate %815 by %c16_i32_77 dim 1 : vector<8x256xf32>, i32 -> vector<8x256xf32>
    %817 = vector.broadcast %54 : f32 to vector<8x256xf32>
    %818 = arith.mulf %817, %816 : vector<8x256xf32>
    %819 = arith.addf %804, %818 : vector<8x256xf32>
    %820 = vector.broadcast %63 : f32 to vector<8x256xf32>
    %821 = arith.mulf %820, %816 : vector<8x256xf32>
    %822 = arith.addf %807, %821 : vector<8x256xf32>
    %823 = vector.broadcast %72 : f32 to vector<8x256xf32>
    %824 = arith.mulf %823, %816 : vector<8x256xf32>
    %825 = arith.addf %810, %824 : vector<8x256xf32>
    %826 = vector.broadcast %57 : f32 to vector<8x256xf32>
    %827 = arith.mulf %826, %815 : vector<8x256xf32>
    %828 = arith.addf %819, %827 : vector<8x256xf32>
    %829 = vector.broadcast %66 : f32 to vector<8x256xf32>
    %830 = arith.mulf %829, %815 : vector<8x256xf32>
    %831 = arith.addf %822, %830 : vector<8x256xf32>
    %832 = vector.broadcast %75 : f32 to vector<8x256xf32>
    %833 = arith.mulf %832, %815 : vector<8x256xf32>
    %834 = arith.addf %825, %833 : vector<8x256xf32>
    %c240_i32_78 = arith.constant 240 : i32
    %835 = tpu.dynamic_rotate %815 by %c240_i32_78 dim 1 : vector<8x256xf32>, i32 -> vector<8x256xf32>
    %836 = vector.broadcast %60 : f32 to vector<8x256xf32>
    %837 = arith.mulf %836, %835 : vector<8x256xf32>
    %838 = arith.addf %828, %837 : vector<8x256xf32>
    %839 = vector.broadcast %69 : f32 to vector<8x256xf32>
    %840 = arith.mulf %839, %835 : vector<8x256xf32>
    %841 = arith.addf %831, %840 : vector<8x256xf32>
    %842 = vector.broadcast %78 : f32 to vector<8x256xf32>
    %843 = arith.mulf %842, %835 : vector<8x256xf32>
    %844 = arith.addf %834, %843 : vector<8x256xf32>
    %c16_i32_79 = arith.constant 16 : i32
    %845 = tpu.dynamic_rotate %812 by %c16_i32_79 dim 1 : vector<8x256xf32>, i32 -> vector<8x256xf32>
    %846 = vector.broadcast %55 : f32 to vector<8x256xf32>
    %847 = arith.mulf %846, %845 : vector<8x256xf32>
    %848 = arith.addf %838, %847 : vector<8x256xf32>
    %849 = vector.broadcast %64 : f32 to vector<8x256xf32>
    %850 = arith.mulf %849, %845 : vector<8x256xf32>
    %851 = arith.addf %841, %850 : vector<8x256xf32>
    %852 = vector.broadcast %73 : f32 to vector<8x256xf32>
    %853 = arith.mulf %852, %845 : vector<8x256xf32>
    %854 = arith.addf %844, %853 : vector<8x256xf32>
    %855 = vector.broadcast %58 : f32 to vector<8x256xf32>
    %856 = arith.mulf %855, %812 : vector<8x256xf32>
    %857 = arith.addf %848, %856 : vector<8x256xf32>
    %858 = vector.broadcast %67 : f32 to vector<8x256xf32>
    %859 = arith.mulf %858, %812 : vector<8x256xf32>
    %860 = arith.addf %851, %859 : vector<8x256xf32>
    %861 = vector.broadcast %76 : f32 to vector<8x256xf32>
    %862 = arith.mulf %861, %812 : vector<8x256xf32>
    %863 = arith.addf %854, %862 : vector<8x256xf32>
    %c240_i32_80 = arith.constant 240 : i32
    %864 = tpu.dynamic_rotate %812 by %c240_i32_80 dim 1 : vector<8x256xf32>, i32 -> vector<8x256xf32>
    %865 = vector.broadcast %61 : f32 to vector<8x256xf32>
    %866 = arith.mulf %865, %864 : vector<8x256xf32>
    %867 = arith.addf %857, %866 : vector<8x256xf32>
    %868 = vector.broadcast %70 : f32 to vector<8x256xf32>
    %869 = arith.mulf %868, %864 : vector<8x256xf32>
    %870 = arith.addf %860, %869 : vector<8x256xf32>
    %871 = vector.broadcast %79 : f32 to vector<8x256xf32>
    %872 = arith.mulf %871, %864 : vector<8x256xf32>
    %873 = arith.addf %863, %872 : vector<8x256xf32>
    %c15_i32_81 = arith.constant 15 : i32
    %874 = tpu.dynamic_rotate %812 by %c15_i32_81 dim 1 : vector<8x256xf32>, i32 -> vector<8x256xf32>
    %c255_i32_82 = arith.constant 255 : i32
    %875 = tpu.dynamic_rotate %812 by %c255_i32_82 dim 1 : vector<8x256xf32>, i32 -> vector<8x256xf32>
    %876 = arith.select %101, %874, %875 : vector<8x256xi1>, vector<8x256xf32>
    %c16_i32_83 = arith.constant 16 : i32
    %877 = tpu.dynamic_rotate %876 by %c16_i32_83 dim 1 : vector<8x256xf32>, i32 -> vector<8x256xf32>
    %878 = vector.broadcast %56 : f32 to vector<8x256xf32>
    %879 = arith.mulf %878, %877 : vector<8x256xf32>
    %880 = arith.addf %867, %879 : vector<8x256xf32>
    %881 = vector.broadcast %65 : f32 to vector<8x256xf32>
    %882 = arith.mulf %881, %877 : vector<8x256xf32>
    %883 = arith.addf %870, %882 : vector<8x256xf32>
    %884 = vector.broadcast %74 : f32 to vector<8x256xf32>
    %885 = arith.mulf %884, %877 : vector<8x256xf32>
    %886 = arith.addf %873, %885 : vector<8x256xf32>
    %887 = vector.broadcast %59 : f32 to vector<8x256xf32>
    %888 = arith.mulf %887, %876 : vector<8x256xf32>
    %889 = arith.addf %880, %888 : vector<8x256xf32>
    %890 = vector.broadcast %68 : f32 to vector<8x256xf32>
    %891 = arith.mulf %890, %876 : vector<8x256xf32>
    %892 = arith.addf %883, %891 : vector<8x256xf32>
    %893 = vector.broadcast %77 : f32 to vector<8x256xf32>
    %894 = arith.mulf %893, %876 : vector<8x256xf32>
    %895 = arith.addf %886, %894 : vector<8x256xf32>
    %c240_i32_84 = arith.constant 240 : i32
    %896 = tpu.dynamic_rotate %876 by %c240_i32_84 dim 1 : vector<8x256xf32>, i32 -> vector<8x256xf32>
    %897 = vector.broadcast %62 : f32 to vector<8x256xf32>
    %898 = arith.mulf %897, %896 : vector<8x256xf32>
    %899 = arith.addf %889, %898 : vector<8x256xf32>
    %900 = vector.broadcast %71 : f32 to vector<8x256xf32>
    %901 = arith.mulf %900, %896 : vector<8x256xf32>
    %902 = arith.addf %892, %901 : vector<8x256xf32>
    %903 = vector.broadcast %80 : f32 to vector<8x256xf32>
    %904 = arith.mulf %903, %896 : vector<8x256xf32>
    %905 = arith.addf %895, %904 : vector<8x256xf32>
    %c1_i32_85 = arith.constant 1 : i32
    %906 = tpu.dynamic_rotate %524 by %c1_i32_85 dim 0 : vector<8x256xf32>, i32 -> vector<8x256xf32>
    %c7_i32 = arith.constant 7 : i32
    %907 = tpu.dynamic_rotate %530 by %c7_i32 dim 0 : vector<8x256xf32>, i32 -> vector<8x256xf32>
    %908 = arith.addf %906, %527 : vector<8x256xf32>
    %909 = arith.addf %908, %907 : vector<8x256xf32>
    %c0_86 = arith.constant 0 : index
    %c0_87 = arith.constant 0 : index
    %c0_88 = arith.constant 0 : index
    %c0_89 = arith.constant 0 : index
    %910 = vector.load %arg3[%c0_86, %c0_87, %c0_88, %c0_89] : memref<1x3x8x256xf32, #tpu.memory_space<vmem>>, vector<1x1x8x256xf32>
    %911 = vector.shape_cast %910 : vector<1x1x8x256xf32> to vector<8x256xf32>
    %912 = vector.shape_cast %909 : vector<8x256xf32> to vector<1x1x8x256xf32>
    tpu.vector_store %arg3[%c0_86, %c0_87, %c0_88, %c0_89], %912 {strides = array<i32>} : memref<1x3x8x256xf32, #tpu.memory_space<vmem>>, vector<1x1x8x256xf32>,
    %c1_i32_90 = arith.constant 1 : i32
    %913 = tpu.dynamic_rotate %795 by %c1_i32_90 dim 0 : vector<8x256xf32>, i32 -> vector<8x256xf32>
    %c7_i32_91 = arith.constant 7 : i32
    %914 = tpu.dynamic_rotate %801 by %c7_i32_91 dim 0 : vector<8x256xf32>, i32 -> vector<8x256xf32>
    %915 = arith.addf %913, %798 : vector<8x256xf32>
    %916 = arith.addf %915, %914 : vector<8x256xf32>
    %c0_92 = arith.constant 0 : index
    %c1_93 = arith.constant 1 : index
    %c0_94 = arith.constant 0 : index
    %c0_95 = arith.constant 0 : index
    %917 = vector.load %arg3[%c0_92, %c1_93, %c0_94, %c0_95] : memref<1x3x8x256xf32, #tpu.memory_space<vmem>>, vector<1x1x8x256xf32>
    %918 = vector.shape_cast %917 : vector<1x1x8x256xf32> to vector<8x256xf32>
    %919 = vector.shape_cast %916 : vector<8x256xf32> to vector<1x1x8x256xf32>
    tpu.vector_store %arg3[%c0_92, %c1_93, %c0_94, %c0_95], %919 {strides = array<i32>} : memref<1x3x8x256xf32, #tpu.memory_space<vmem>>, vector<1x1x8x256xf32>,
    %c1_i32_96 = arith.constant 1 : i32
    %920 = tpu.dynamic_rotate %899 by %c1_i32_96 dim 0 : vector<8x256xf32>, i32 -> vector<8x256xf32>
    %c7_i32_97 = arith.constant 7 : i32
    %921 = tpu.dynamic_rotate %905 by %c7_i32_97 dim 0 : vector<8x256xf32>, i32 -> vector<8x256xf32>
    %922 = arith.addf %920, %902 : vector<8x256xf32>
    %923 = arith.addf %922, %921 : vector<8x256xf32>
    %c0_98 = arith.constant 0 : index
    %c2_99 = arith.constant 2 : index
    %c0_100 = arith.constant 0 : index
    %c0_101 = arith.constant 0 : index
    %924 = vector.load %arg3[%c0_98, %c2_99, %c0_100, %c0_101] : memref<1x3x8x256xf32, #tpu.memory_space<vmem>>, vector<1x1x8x256xf32>
    %925 = vector.shape_cast %924 : vector<1x1x8x256xf32> to vector<8x256xf32>
    %926 = vector.shape_cast %923 : vector<8x256xf32> to vector<1x1x8x256xf32>
    tpu.vector_store %arg3[%c0_98, %c2_99, %c0_100, %c0_101], %926 {strides = array<i32>} : memref<1x3x8x256xf32, #tpu.memory_space<vmem>>, vector<1x1x8x256xf32>,
    return
  }
  func.func @transform_0(%arg0: i32, %arg1: memref<81xf32, #tpu.memory_space<smem>>) -> (i32, i32, i32, i32) {
    %c0_i32 = arith.constant 0 : i32
    %c0_i32_0 = arith.constant 0 : i32
    %c0_i32_1 = arith.constant 0 : i32
    %c0_i32_2 = arith.constant 0 : i32
    return %arg0, %c0_i32, %c0_i32_0, %c0_i32_1 : i32, i32, i32, i32
  }
  func.func @transform_1(%arg0: i32, %arg1: memref<81xf32, #tpu.memory_space<smem>>) -> (i32, i32, i32, i32) {
    %c0_i32 = arith.constant 0 : i32
    %c0_i32_0 = arith.constant 0 : i32
    %c0_i32_1 = arith.constant 0 : i32
    %c0_i32_2 = arith.constant 0 : i32
    return %arg0, %c0_i32, %c0_i32_0, %c0_i32_1 : i32, i32, i32, i32
  }
}

</mosaic_0001>

<llo_original>
// kernel: tpu_custom_call.1
$region0: #{tpu_custom_call.1}
  #allocation0 [shape = 'u32[]', space=smem, size = 0x4, offset = 0x4, fixed_abs, tag = 'smem constant byte address 0x4 - core index']
  #allocation1 [shape = 'u32[72,128]{1,0:T(1,128)}', space=vmem, size = 0x9000, scoped, tag = 'internal scratch']
  #allocation2 [shape = 's32[1]{0}', space=sflag, size = 0x4, scoped, tag = 'scoped memory for tpu_custom_call.1']
  #allocation3 [shape = 'u8[512]{0}', space=smem, size = 0x200, scoped, tag = 'prefetched SMEM operand 0']
  %s0 = inlined_call_operand.hbm [shape: f32[81], index: 0, kind: input, shape index: {}]
  %s1 = inlined_call_operand.hbm [shape: f32[2,6,8,256], index: 1, kind: input, shape index: {}]
  %s2 = inlined_call_operand.hbm [shape: f32[2,3,8,256], index: 2, kind: output, shape index: {}]
  %s3 = sld [smem:[#allocation0]]
  $region41: #{tpu_custom_call.1} parent=0
    _
  %s5 = ssub.s32 1, %s3
  %s6 = scalar_select 0, %s5, %s3
  %s8 = sshll.u32 %s0, 4
  %s9 = int_to_ptr.hbm [resolvable:$true] %s8
  %11 = dma.hbm_to_smem %s9, 16, [#allocation3], [#allocation2]
  %13 = dma.done [#allocation2], 16
  %14 = sfence
  $region1: #{tpu_custom_call.1} parent=0
    #allocation4 [shape = 'u8[98304]{0}', space=vmem, size = 0x18000, scoped, tag = 'input window, operand 1']
    #allocation5 [shape = 's32[2]{0}', space=sflag, size = 0x8, scoped, tag = 'scoped memory for tpu_custom_call.1']
    #allocation6 [shape = 's32[2]{0}', space=sflag, size = 0x8, scoped, tag = 'scoped memory for tpu_custom_call.1']
    #allocation7 [shape = 'u8[49152]{0}', space=vmem, size = 0xc000, scoped, tag = 'output window, operand 0']
    %15 = vsyncpa [#allocation5], 0
    %s16 = scalar_lea.sflag [#allocation5], 1
    %17 = vsyncpa %s16, 0
    %18 = vsyncpa [#allocation6], 0
    %s19 = scalar_lea.sflag [#allocation6], 1
    %20 = vsyncpa %s19, 0
    loop: start=0, step=1, limit=4
    $region2: #{tpu_custom_call.1} parent=1 // loop_pre_header
      _
    $region3: #{tpu_custom_call.1} parent=1 // loop_header
      %s22 = sphi 0, %s26
      %p23 = scmp.ge.s32.totalorder %s22, 4
      %s32 = sphi 0, %s34
      %s35 = sphi 0, %s32
      %s36 = sphi 0, %s35
      %s52 = sphi 0, %s36
      %s58 = sphi 0, %s60
      %s61 = sphi 0, %s58
      %s62 = sphi 0, %s61
      %s78 = sphi 0, %s62
    $region4: #{tpu_custom_call.1} parent=1 // loop_header_branch
      %25 = sbr.rel (%p23) target = $region8
    $region5: #{tpu_custom_call.1} parent=1 // loop_body
      %s27 = ssub.s32 %s22, 1
      %s28 = ssub.s32 %s22, 2
      %s29 = sadd.s32 %s22, 1
      %s30 = ssub.s32 %s22, %s29
      %p31 = scmp.eq.s32.totalorder %s30, 0
      %s33 = sadd.s32 %s32, 1
      %s34 = scalar_select %p31, %s32, %s33
      %p37 = pneg %p31
      %p38 = scmp.eq.s32.totalorder %s22, 1
      %p39 = por %p37, %p38
      %p40 = scmp.ne.s32.totalorder %s32, %s35
      %p41 = scmp.eq.s32.totalorder %s22, 0
      %p42 = por %p40, %p41
      %p43 = scmp.ne.s32.totalorder %s32, %s35
      %p44 = scmp.eq.s32.totalorder %s27, 1
      %p45 = por %p43, %p44
      %p46 = scmp.ne.s32.totalorder %s35, %s36
      %p47 = scmp.eq.s32.totalorder %s27, 0
      %p48 = por %p46, %p47
      %p49 = scmp.ne.s32.totalorder %s35, %s36
      %p50 = scmp.eq.s32.totalorder %s28, 1
      %p51 = por %p49, %p50
      %p53 = scmp.ne.s32.totalorder %s36, %s52
      %p54 = scmp.eq.s32.totalorder %s28, 0
      %p55 = por %p53, %p54
      %s56 = ssub.s32 %s22, %s29
      %p57 = scmp.eq.s32.totalorder %s56, 0
      %s59 = sadd.s32 %s58, 1
      %s60 = scalar_select %p57, %s58, %s59
      %p63 = pneg %p57
      %p64 = scmp.eq.s32.totalorder %s22, 1
      %p65 = por %p63, %p64
      %p66 = scmp.ne.s32.totalorder %s58, %s61
      %p67 = scmp.eq.s32.totalorder %s22, 0
      %p68 = por %p66, %p67
      %p69 = scmp.ne.s32.totalorder %s58, %s61
      %p70 = scmp.eq.s32.totalorder %s27, 1
      %p71 = por %p69, %p70
      %p72 = scmp.ne.s32.totalorder %s61, %s62
      %p73 = scmp.eq.s32.totalorder %s27, 0
      %p74 = por %p72, %p73
      %p75 = scmp.ne.s32.totalorder %s61, %s62
      %p76 = scmp.eq.s32.totalorder %s28, 1
      %p77 = por %p75, %p76
      %p79 = scmp.ne.s32.totalorder %s62, %s78
      %p80 = scmp.eq.s32.totalorder %s28, 0
      %p81 = por %p79, %p80
      %p82 = scmp.le.s32.totalorder 1, %s22
      %p83 = scmp.lt.s32.totalorder %s22, 3
      %p84 = pnand %p82, %p83
      %p85 = pneg %p84
      // Predicated region
      $region9: #{tpu_custom_call.1} parent=5 // pred_check
        _
      $region10: #{tpu_custom_call.1} parent=5 // pred_check_branch
        %87 = sbr.rel (%p84) target = $region12
      $region11: #{tpu_custom_call.1} parent=5 // pred_region
        %s88 = ssub.s32 %s22, 1
      $region12: #{tpu_custom_call.1} parent=5 // pred_fallthru
        _
      %p89 = scmp.lt.s32.totalorder %s22, 2
      // Predicated region
      $region13: #{tpu_custom_call.1} parent=5 // pred_check
        %p90 = pneg %p89
      $region14: #{tpu_custom_call.1} parent=5 // pred_check_branch
        %92 = sbr.rel (%p90) target = $region16
      $region15: #{tpu_custom_call.1} parent=5 // pred_region
        // Predicated region
        $region17: #{tpu_custom_call.1} parent=15 // pred_check
          %p93 = pneg %p42
        $region18: #{tpu_custom_call.1} parent=15 // pred_check_branch
          %95 = sbr.rel (%p93) target = $region20
        $region19: #{tpu_custom_call.1} parent=15 // pred_region
          %s96 = sand.u32 %s32, 1
          %s97 = scalar_lea.sflag [#allocation5], %s96
          %s98 = sand.u32 %s32, 1
          %s99 = smul.addr %s98, 96
          %s100 = scalar_lea.vmem [#allocation4], %s99
          %102 = vsyncadd %s97, 0
          %s103 = smul.addr %s22, 12
          %s104 = smul.addr %s103, 8
          %s105 = scalar_lea.hbm %s1, %s104
          %s106 = sshll.u32 %s105, 4
          %s107 = int_to_ptr.hbm [resolvable:$true] %s106
          %s108 = sshll.u32 %s100, 4
          %s109 = int_to_ptr.vmem [resolvable:$true] %s108
          %114 = dma.hbm_to_vmem [thread:$0]  %s107, 1536, %s109, %s97, 256, 256, 16
        $region20: #{tpu_custom_call.1} parent=15 // pred_fallthru
          _
      $region16: #{tpu_custom_call.1} parent=5 // pred_fallthru
        _
      %p115 = scmp.le.s32.totalorder 1, %s22
      %p116 = scmp.lt.s32.totalorder %s22, 3
      %p117 = pnand %p115, %p116
      %p118 = pneg %p117
      // Predicated region
      $region21: #{tpu_custom_call.1} parent=5 // pred_check
        _
      $region22: #{tpu_custom_call.1} parent=5 // pred_check_branch
        %120 = sbr.rel (%p117) target = $region24
      $region23: #{tpu_custom_call.1} parent=5 // pred_region
        %s121 = ssub.s32 %s22, 1
        %s122 = sand.u32 %s35, 1
        %s123 = scalar_lea.sflag [#allocation5], %s122
        %s124 = sand.u32 %s35, 1
        %s125 = smul.addr %s124, 96
        %s126 = scalar_lea.vmem [#allocation4], %s125
        // Predicated region
        $region25: #{tpu_custom_call.1} parent=23 // pred_check
          %p127 = pneg %p48
        $region26: #{tpu_custom_call.1} parent=23 // pred_check_branch
          %129 = sbr.rel (%p127) target = $region28
        $region27: #{tpu_custom_call.1} parent=23 // pred_region
          %131 = dma.done %s123, 1536
        $region28: #{tpu_custom_call.1} parent=23 // pred_fallthru
          _
        %s132 = sand.u32 %s35, 1
        %s133 = scalar_lea.sflag [#allocation5], %s132
        %s134 = sand.u32 %s35, 1
        %s135 = smul.addr %s134, 96
        %s136 = scalar_lea.vmem [#allocation4], %s135
        %p137 = pneg %p48
        %p138 = pneg %p45
        %p139 = pneg %p74
        %p140 = pneg %p71
        %s141 = sand.u32 %s61, 1
        %s142 = scalar_lea.sflag [#allocation6], %s141
        %s143 = sand.u32 %s61, 1
        %s144 = smul.addr %s143, 48
        %s145 = scalar_lea.vmem [#allocation7], %s144
        %s146 = sld [smem:[#allocation3]]
        %s147 = sld [smem:[#allocation3 + $0x1]]
        %s148 = sld [smem:[#allocation3 + $0x2]]
        %s149 = sld [smem:[#allocation3 + $0x3]]
        %s150 = sld [smem:[#allocation3 + $0x4]]
        %s151 = sld [smem:[#allocation3 + $0x5]]
        %s152 = sld [smem:[#allocation3 + $0x6]]
        %s153 = sld [smem:[#allocation3 + $0x7]]
        %s154 = sld [smem:[#allocation3 + $0x8]]
        %s155 = sld [smem:[#allocation3 + $0x9]]
        %s156 = sld [smem:[#allocation3 + $0xa]]
        %s157 = sld [smem:[#allocation3 + $0xb]]
        %s158 = sld [smem:[#allocation3 + $0xc]]
        %s159 = sld [smem:[#allocation3 + $0xd]]
        %s160 = sld [smem:[#allocation3 + $0xe]]
        %s161 = sld [smem:[#allocation3 + $0xf]]
        %s162 = sld [smem:[#allocation3 + $0x10]]
        %s163 = sld [smem:[#allocation3 + $0x11]]
        %s164 = sld [smem:[#allocation3 + $0x12]]
        %s165 = sld [smem:[#allocation3 + $0x13]]
        %s166 = sld [smem:[#allocation3 + $0x14]]
        %s167 = sld [smem:[#allocation3 + $0x15]]
        %s168 = sld [smem:[#allocation3 + $0x16]]
        %s169 = sld [smem:[#allocation3 + $0x17]]
        %s170 = sld [smem:[#allocation3 + $0x18]]
        %s171 = sld [smem:[#allocation3 + $0x19]]
        %s172 = sld [smem:[#allocation3 + $0x1a]]
        %s173 = sld [smem:[#allocation3 + $0x1b]]
        %s174 = sld [smem:[#allocation3 + $0x1c]]
        %s175 = sld [smem:[#allocation3 + $0x1d]]
        %s176 = sld [smem:[#allocation3 + $0x1e]]
        %s177 = sld [smem:[#allocation3 + $0x1f]]
        %s178 = sld [smem:[#allocation3 + $0x20]]
        %s179 = sld [smem:[#allocation3 + $0x21]]
        %s180 = sld [smem:[#allocation3 + $0x22]]
        %s181 = sld [smem:[#allocation3 + $0x23]]
        %s182 = sld [smem:[#allocation3 + $0x24]]
        %s183 = sld [smem:[#allocation3 + $0x25]]
        %s184 = sld [smem:[#allocation3 + $0x26]]
        %s185 = sld [smem:[#allocation3 + $0x27]]
        %s186 = sld [smem:[#allocation3 + $0x28]]
        %s187 = sld [smem:[#allocation3 + $0x29]]
        %s188 = sld [smem:[#allocation3 + $0x2a]]
        %s189 = sld [smem:[#allocation3 + $0x2b]]
        %s190 = sld [smem:[#allocation3 + $0x2c]]
        %s191 = sld [smem:[#allocation3 + $0x2d]]
        %s192 = sld [smem:[#allocation3 + $0x2e]]
        %s193 = sld [smem:[#allocation3 + $0x2f]]
        %s194 = sld [smem:[#allocation3 + $0x30]]
        %s195 = sld [smem:[#allocation3 + $0x31]]
        %s196 = sld [smem:[#allocation3 + $0x32]]
        %s197 = sld [smem:[#allocation3 + $0x33]]
        %s198 = sld [smem:[#allocation3 + $0x34]]
        %s199 = sld [smem:[#allocation3 + $0x35]]
        %s200 = sld [smem:[#allocation3 + $0x36]]
        %s201 = sld [smem:[#allocation3 + $0x37]]
        %s202 = sld [smem:[#allocation3 + $0x38]]
        %s203 = sld [smem:[#allocation3 + $0x39]]
        %s204 = sld [smem:[#allocation3 + $0x3a]]
        %s205 = sld [smem:[#allocation3 + $0x3b]]
        %s206 = sld [smem:[#allocation3 + $0x3c]]
        %s207 = sld [smem:[#allocation3 + $0x3d]]
        %s208 = sld [smem:[#allocation3 + $0x3e]]
        %s209 = sld [smem:[#allocation3 + $0x3f]]
        %s210 = sld [smem:[#allocation3 + $0x40]]
        %s211 = sld [smem:[#allocation3 + $0x41]]
        %s212 = sld [smem:[#allocation3 + $0x42]]
        %s213 = sld [smem:[#allocation3 + $0x43]]
        %s214 = sld [smem:[#allocation3 + $0x44]]
        %s215 = sld [smem:[#allocation3 + $0x45]]
        %s216 = sld [smem:[#allocation3 + $0x46]]
        %s217 = sld [smem:[#allocation3 + $0x47]]
        %s218 = sld [smem:[#allocation3 + $0x48]]
        %s219 = sld [smem:[#allocation3 + $0x49]]
        %s220 = sld [smem:[#allocation3 + $0x4a]]
        %s221 = sld [smem:[#allocation3 + $0x4b]]
        %s222 = sld [smem:[#allocation3 + $0x4c]]
        %s223 = sld [smem:[#allocation3 + $0x4d]]
        %s224 = sld [smem:[#allocation3 + $0x4e]]
        %s225 = sld [smem:[#allocation3 + $0x4f]]
        %s226 = sld [smem:[#allocation3 + $0x50]]
        %v227 = vlaneseq
        %v228 = vand.u32 %v227, 127
        %v229 = vadd.s32 %v228, 128
        %vm230 = vcmp.lt.s32.totalorder %v228, 0
        %v231 = vsub.s32 0, %v228
        %v232 = vsel %vm230, %v231, %v228
        %v233 = vshrl.u32 %v232, 4
        %v234 = vand.u32 %v232, 15
        %v235 = vsub.s32 0, %v234
        %v236 = vsel %vm230, %v235, %v234
        %vm237 = vcmp.lt.s32.totalorder %v229, 0
        %v238 = vsub.s32 0, %v229
        %v239 = vsel %vm237, %v238, %v229
        %v240 = vshrl.u32 %v239, 4
        %v241 = vand.u32 %v239, 15
        %v242 = vsub.s32 0, %v241
        %v243 = vsel %vm237, %v242, %v241
        %vm244 = vcmp.ne.s32.totalorder %v236, 0
        %vm245 = vcmp.ne.s32.totalorder %v243, 0
        %vm246 = vcmp.lt.s32.totalorder %v236, 0
        %vm247 = vcmp.lt.s32.totalorder %v243, 0
        %vm248 = vmand %vm246, %vm244
        %vm249 = vmand %vm247, %vm245
        %v250 = vadd.s32 %v236, 16
        %v251 = vadd.s32 %v243, 16
        %v252 = vsel %vm248, %v250, %v236
        %v253 = vsel %vm249, %v251, %v243
        %vm254 = vcmp.eq.s32.totalorder %v252, 0
        %vm255 = vcmp.eq.s32.totalorder %v253, 0
        %vm256 = vcmp.eq.s32.totalorder %v252, 15
        %vm257 = vcmp.eq.s32.totalorder %v253, 15
        %v258 = vld [vmem:[%s126] sm:$0xff]
        %v259 = vld [vmem:[%s126 + $0x8] sm:$0xff]
        %260 = vrot.lane.b32.xlu0 %v258, 113
        %v261 = vpop.permute.xlu0 %260
        %262 = vrot.lane.b32.xlu0 %v259, 113
        %v263 = vpop.permute.xlu0 %262
        %vm264 = vcmp.lt.s32.totalorder %v228, 113
        %v265 = vsel %vm264, %v261, %v263
        %v266 = vsel %vm264, %v263, %v261
        %267 = vrot.lane.b32.xlu0 %v258, 1
        %v268 = vpop.permute.xlu0 %267
        %269 = vrot.lane.b32.xlu0 %v259, 1
        %v270 = vpop.permute.xlu0 %269
        %vm271 = vcmp.lt.s32.totalorder %v228, 1
        %v272 = vsel %vm271, %v268, %v270
        %v273 = vsel %vm271, %v270, %v268
        %v274 = vsel %vm254, %v265, %v273
        %v275 = vsel %vm255, %v266, %v272
        %276 = vrot.lane.b32.xlu0 %v274, 16
        %v277 = vpop.permute.xlu0 %276
        %278 = vrot.lane.b32.xlu0 %v275, 16
        %v279 = vpop.permute.xlu0 %278
        %vm280 = vcmp.lt.s32.totalorder %v228, 16
        %v281 = vsel %vm280, %v277, %v279
        %v282 = vsel %vm280, %v279, %v277
        %v283 = vstv %s146
        %v284 = vmul.f32 %v283, %v282
        %v285 = vmul.f32 %v283, %v281
        %v286 = vstv %s155
        %v287 = vmul.f32 %v286, %v282
        %v288 = vmul.f32 %v286, %v281
        %v289 = vstv %s164
        %v290 = vmul.f32 %v289, %v282
        %v291 = vmul.f32 %v289, %v281
        %v292 = vstv %s149
        %v293 = vmul.f32 %v292, %v274
        %v294 = vmul.f32 %v292, %v275
        %v295 = vadd.f32 %v284, %v293
        %v296 = vadd.f32 %v285, %v294
        %v297 = vstv %s158
        %v298 = vmul.f32 %v297, %v274
        %v299 = vmul.f32 %v297, %v275
        %v300 = vadd.f32 %v287, %v298
        %v301 = vadd.f32 %v288, %v299
        %v302 = vstv %s167
        %v303 = vmul.f32 %v302, %v274
        %v304 = vmul.f32 %v302, %v275
        %v305 = vadd.f32 %v290, %v303
        %v306 = vadd.f32 %v291, %v304
        %307 = vrot.lane.b32.xlu0 %v274, 112
        %v308 = vpop.permute.xlu0 %307
        %309 = vrot.lane.b32.xlu0 %v275, 112
        %v310 = vpop.permute.xlu0 %309
        %vm311 = vcmp.lt.s32.totalorder %v228, 112
        %v312 = vsel %vm311, %v308, %v310
        %v313 = vsel %vm311, %v310, %v308
        %v314 = vstv %s152
        %v315 = vmul.f32 %v314, %v312
        %v316 = vmul.f32 %v314, %v313
        %v317 = vadd.f32 %v295, %v315
        %v318 = vadd.f32 %v296, %v316
        %v319 = vstv %s161
        %v320 = vmul.f32 %v319, %v312
        %v321 = vmul.f32 %v319, %v313
        %v322 = vadd.f32 %v300, %v320
        %v323 = vadd.f32 %v301, %v321
        %v324 = vstv %s170
        %v325 = vmul.f32 %v324, %v312
        %v326 = vmul.f32 %v324, %v313
        %v327 = vadd.f32 %v305, %v325
        %v328 = vadd.f32 %v306, %v326
        %329 = vrot.lane.b32.xlu0 %v258, 16
        %v330 = vpop.permute.xlu0 %329
        %331 = vrot.lane.b32.xlu0 %v259, 16
        %v332 = vpop.permute.xlu0 %331
        %v333 = vsel %vm280, %v330, %v332
        %v334 = vsel %vm280, %v332, %v330
        %v335 = vstv %s147
        %v336 = vmul.f32 %v335, %v334
        %v337 = vmul.f32 %v335, %v333
        %v338 = vadd.f32 %v317, %v336
        %v339 = vadd.f32 %v318, %v337
        %v340 = vstv %s156
        %v341 = vmul.f32 %v340, %v334
        %v342 = vmul.f32 %v340, %v333
        %v343 = vadd.f32 %v322, %v341
        %v344 = vadd.f32 %v323, %v342
        %v345 = vstv %s165
        %v346 = vmul.f32 %v345, %v334
        %v347 = vmul.f32 %v345, %v333
        %v348 = vadd.f32 %v327, %v346
        %v349 = vadd.f32 %v328, %v347
        %v350 = vstv %s150
        %v351 = vmul.f32 %v350, %v258
        %v352 = vmul.f32 %v350, %v259
        %v353 = vadd.f32 %v338, %v351
        %v354 = vadd.f32 %v339, %v352
        %v355 = vstv %s159
        %v356 = vmul.f32 %v355, %v258
        %v357 = vmul.f32 %v355, %v259
        %v358 = vadd.f32 %v343, %v356
        %v359 = vadd.f32 %v344, %v357
        %v360 = vstv %s168
        %v361 = vmul.f32 %v360, %v258
        %v362 = vmul.f32 %v360, %v259
        %v363 = vadd.f32 %v348, %v361
        %v364 = vadd.f32 %v349, %v362
        %365 = vrot.lane.b32.xlu0 %v258, 112
        %v366 = vpop.permute.xlu0 %365
        %367 = vrot.lane.b32.xlu0 %v259, 112
        %v368 = vpop.permute.xlu0 %367
        %v369 = vsel %vm311, %v366, %v368
        %v370 = vsel %vm311, %v368, %v366
        %v371 = vstv %s153
        %v372 = vmul.f32 %v371, %v369
        %v373 = vmul.f32 %v371, %v370
        %v374 = vadd.f32 %v353, %v372
        %v375 = vadd.f32 %v354, %v373
        %v376 = vstv %s162
        %v377 = vmul.f32 %v376, %v369
        %v378 = vmul.f32 %v376, %v370
        %v379 = vadd.f32 %v358, %v377
        %v380 = vadd.f32 %v359, %v378
        %v381 = vstv %s171
        %v382 = vmul.f32 %v381, %v369
        %v383 = vmul.f32 %v381, %v370
        %v384 = vadd.f32 %v363, %v382
        %v385 = vadd.f32 %v364, %v383
        %386 = vrot.lane.b32.xlu0 %v258, 15
        %v387 = vpop.permute.xlu0 %386
        %388 = vrot.lane.b32.xlu0 %v259, 15
        %v389 = vpop.permute.xlu0 %388
        %vm390 = vcmp.lt.s32.totalorder %v228, 15
        %v391 = vsel %vm390, %v387, %v389
        %v392 = vsel %vm390, %v389, %v387
        %393 = vrot.lane.b32.xlu0 %v258, 127
        %v394 = vpop.permute.xlu0 %393
        %395 = vrot.lane.b32.xlu0 %v259, 127
        %v396 = vpop.permute.xlu0 %395
        %vm397 = vcmp.lt.s32.totalorder %v228, 127
        %v398 = vsel %vm397, %v394, %v396
        %v399 = vsel %vm397, %v396, %v394
        %v400 = vsel %vm256, %v392, %v398
        %v401 = vsel %vm257, %v391, %v399
        %402 = vrot.lane.b32.xlu0 %v400, 16
        %v403 = vpop.permute.xlu0 %402
        %404 = vrot.lane.b32.xlu0 %v401, 16
        %v405 = vpop.permute.xlu0 %404
        %v406 = vsel %vm280, %v403, %v405
        %v407 = vsel %vm280, %v405, %v403
        %v408 = vstv %s148
        %v409 = vmul.f32 %v408, %v407
        %v410 = vmul.f32 %v408, %v406
        %v411 = vadd.f32 %v374, %v409
        %v412 = vadd.f32 %v375, %v410
        %v413 = vstv %s157
        %v414 = vmul.f32 %v413, %v407
        %v415 = vmul.f32 %v413, %v406
        %v416 = vadd.f32 %v379, %v414
        %v417 = vadd.f32 %v380, %v415
        %v418 = vstv %s166
        %v419 = vmul.f32 %v418, %v407
        %v420 = vmul.f32 %v418, %v406
        %v421 = vadd.f32 %v384, %v419
        %v422 = vadd.f32 %v385, %v420
        %v423 = vstv %s151
        %v424 = vmul.f32 %v423, %v400
        %v425 = vmul.f32 %v423, %v401
        %v426 = vadd.f32 %v411, %v424
        %v427 = vadd.f32 %v412, %v425
        %v428 = vstv %s160
        %v429 = vmul.f32 %v428, %v400
        %v430 = vmul.f32 %v428, %v401
        %v431 = vadd.f32 %v416, %v429
        %v432 = vadd.f32 %v417, %v430
        %v433 = vstv %s169
        %v434 = vmul.f32 %v433, %v400
        %v435 = vmul.f32 %v433, %v401
        %v436 = vadd.f32 %v421, %v434
        %v437 = vadd.f32 %v422, %v435
        %438 = vrot.lane.b32.xlu0 %v400, 112
        %v439 = vpop.permute.xlu0 %438
        %440 = vrot.lane.b32.xlu0 %v401, 112
        %v441 = vpop.permute.xlu0 %440
        %v442 = vsel %vm311, %v439, %v441
        %v443 = vsel %vm311, %v441, %v439
        %v444 = vstv %s154
        %v445 = vmul.f32 %v444, %v442
        %v446 = vmul.f32 %v444, %v443
        %v447 = vadd.f32 %v426, %v445
        %v448 = vadd.f32 %v427, %v446
        %v449 = vstv %s163
        %v450 = vmul.f32 %v449, %v442
        %v451 = vmul.f32 %v449, %v443
        %v452 = vadd.f32 %v431, %v450
        %v453 = vadd.f32 %v432, %v451
        %v454 = vstv %s172
        %v455 = vmul.f32 %v454, %v442
        %v456 = vmul.f32 %v454, %v443
        %v457 = vadd.f32 %v436, %v455
        %v458 = vadd.f32 %v437, %v456
        %s459 = scalar_lea.vmem %s126, 16 [#allocation4]
        %v460 = vld [vmem:[%s459] sm:$0xff]
        %v461 = vld [vmem:[%s459 + $0x8] sm:$0xff]
        %462 = vrot.lane.b32.xlu0 %v460, 113
        %v463 = vpop.permute.xlu0 %462
        %464 = vrot.lane.b32.xlu0 %v461, 113
        %v465 = vpop.permute.xlu0 %464
        %v466 = vsel %vm264, %v463, %v465
        %v467 = vsel %vm264, %v465, %v463
        %468 = vrot.lane.b32.xlu0 %v460, 1
        %v469 = vpop.permute.xlu0 %468
        %470 = vrot.lane.b32.xlu0 %v461, 1
        %v471 = vpop.permute.xlu0 %470
        %v472 = vsel %vm271, %v469, %v471
        %v473 = vsel %vm271, %v471, %v469
        %v474 = vsel %vm254, %v466, %v473
        %v475 = vsel %vm255, %v467, %v472
        %476 = vrot.lane.b32.xlu0 %v474, 16
        %v477 = vpop.permute.xlu0 %476
        %478 = vrot.lane.b32.xlu0 %v475, 16
        %v479 = vpop.permute.xlu0 %478
        %v480 = vsel %vm280, %v477, %v479
        %v481 = vsel %vm280, %v479, %v477
        %v482 = vstv %s173
        %v483 = vmul.f32 %v482, %v481
        %v484 = vmul.f32 %v482, %v480
        %v485 = vadd.f32 %v447, %v483
        %v486 = vadd.f32 %v448, %v484
        %v487 = vstv %s182
        %v488 = vmul.f32 %v487, %v481
        %v489 = vmul.f32 %v487, %v480
        %v490 = vadd.f32 %v452, %v488
        %v491 = vadd.f32 %v453, %v489
        %v492 = vstv %s191
        %v493 = vmul.f32 %v492, %v481
        %v494 = vmul.f32 %v492, %v480
        %v495 = vadd.f32 %v457, %v493
        %v496 = vadd.f32 %v458, %v494
        %v497 = vmul.f32 %v283, %v481
        %v498 = vmul.f32 %v283, %v480
        %v499 = vmul.f32 %v286, %v481
        %v500 = vmul.f32 %v286, %v480
        %v501 = vmul.f32 %v289, %v481
        %v502 = vmul.f32 %v289, %v480
        %v503 = vstv %s176
        %v504 = vmul.f32 %v503, %v474
        %v505 = vmul.f32 %v503, %v475
        %v506 = vadd.f32 %v485, %v504
        %v507 = vadd.f32 %v486, %v505
        %v508 = vstv %s185
        %v509 = vmul.f32 %v508, %v474
        %v510 = vmul.f32 %v508, %v475
        %v511 = vadd.f32 %v490, %v509
        %v512 = vadd.f32 %v491, %v510
        %v513 = vstv %s194
        %v514 = vmul.f32 %v513, %v474
        %v515 = vmul.f32 %v513, %v475
        %v516 = vadd.f32 %v495, %v514
        %v517 = vadd.f32 %v496, %v515
        %v518 = vmul.f32 %v292, %v474
        %v519 = vmul.f32 %v292, %v475
        %v520 = vadd.f32 %v497, %v518
        %v521 = vadd.f32 %v498, %v519
        %v522 = vmul.f32 %v297, %v474
        %v523 = vmul.f32 %v297, %v475
        %v524 = vadd.f32 %v499, %v522
        %v525 = vadd.f32 %v500, %v523
        %v526 = vmul.f32 %v302, %v474
        %v527 = vmul.f32 %v302, %v475
        %v528 = vadd.f32 %v501, %v526
        %v529 = vadd.f32 %v502, %v527
        %530 = vrot.lane.b32.xlu0 %v474, 112
        %v531 = vpop.permute.xlu0 %530
        %532 = vrot.lane.b32.xlu0 %v475, 112
        %v533 = vpop.permute.xlu0 %532
        %v534 = vsel %vm311, %v531, %v533
        %v535 = vsel %vm311, %v533, %v531
        %v536 = vstv %s179
        %v537 = vmul.f32 %v536, %v534
        %v538 = vmul.f32 %v536, %v535
        %v539 = vadd.f32 %v506, %v537
        %v540 = vadd.f32 %v507, %v538
        %v541 = vstv %s188
        %v542 = vmul.f32 %v541, %v534
        %v543 = vmul.f32 %v541, %v535
        %v544 = vadd.f32 %v511, %v542
        %v545 = vadd.f32 %v512, %v543
        %v546 = vstv %s197
        %v547 = vmul.f32 %v546, %v534
        %v548 = vmul.f32 %v546, %v535
        %v549 = vadd.f32 %v516, %v547
        %v550 = vadd.f32 %v517, %v548
        %v551 = vmul.f32 %v314, %v534
        %v552 = vmul.f32 %v314, %v535
        %v553 = vadd.f32 %v520, %v551
        %v554 = vadd.f32 %v521, %v552
        %v555 = vmul.f32 %v319, %v534
        %v556 = vmul.f32 %v319, %v535
        %v557 = vadd.f32 %v524, %v555
        %v558 = vadd.f32 %v525, %v556
        %v559 = vmul.f32 %v324, %v534
        %v560 = vmul.f32 %v324, %v535
        %v561 = vadd.f32 %v528, %v559
        %v562 = vadd.f32 %v529, %v560
        %563 = vrot.lane.b32.xlu0 %v460, 16
        %v564 = vpop.permute.xlu0 %563
        %565 = vrot.lane.b32.xlu0 %v461, 16
        %v566 = vpop.permute.xlu0 %565
        %v567 = vsel %vm280, %v564, %v566
        %v568 = vsel %vm280, %v566, %v564
        %v569 = vstv %s174
        %v570 = vmul.f32 %v569, %v568
        %v571 = vmul.f32 %v569, %v567
        %v572 = vadd.f32 %v539, %v570
        %v573 = vadd.f32 %v540, %v571
        %v574 = vstv %s183
        %v575 = vmul.f32 %v574, %v568
        %v576 = vmul.f32 %v574, %v567
        %v577 = vadd.f32 %v544, %v575
        %v578 = vadd.f32 %v545, %v576
        %v579 = vstv %s192
        %v580 = vmul.f32 %v579, %v568
        %v581 = vmul.f32 %v579, %v567
        %v582 = vadd.f32 %v549, %v580
        %v583 = vadd.f32 %v550, %v581
        %v584 = vmul.f32 %v335, %v568
        %v585 = vmul.f32 %v335, %v567
        %v586 = vadd.f32 %v553, %v584
        %v587 = vadd.f32 %v554, %v585
        %v588 = vmul.f32 %v340, %v568
        %v589 = vmul.f32 %v340, %v567
        %v590 = vadd.f32 %v557, %v588
        %v591 = vadd.f32 %v558, %v589
        %v592 = vmul.f32 %v345, %v568
        %v593 = vmul.f32 %v345, %v567
        %v594 = vadd.f32 %v561, %v592
        %v595 = vadd.f32 %v562, %v593
        %v596 = vstv %s177
        %v597 = vmul.f32 %v596, %v460
        %v598 = vmul.f32 %v596, %v461
        %v599 = vadd.f32 %v572, %v597
        %v600 = vadd.f32 %v573, %v598
        %v601 = vstv %s186
        %v602 = vmul.f32 %v601, %v460
        %v603 = vmul.f32 %v601, %v461
        %v604 = vadd.f32 %v577, %v602
        %v605 = vadd.f32 %v578, %v603
        %v606 = vstv %s195
        %v607 = vmul.f32 %v606, %v460
        %v608 = vmul.f32 %v606, %v461
        %v609 = vadd.f32 %v582, %v607
        %v610 = vadd.f32 %v583, %v608
        %v611 = vmul.f32 %v350, %v460
        %v612 = vmul.f32 %v350, %v461
        %v613 = vadd.f32 %v586, %v611
        %v614 = vadd.f32 %v587, %v612
        %v615 = vmul.f32 %v355, %v460
        %v616 = vmul.f32 %v355, %v461
        %v617 = vadd.f32 %v590, %v615
        %v618 = vadd.f32 %v591, %v616
        %v619 = vmul.f32 %v360, %v460
        %v620 = vmul.f32 %v360, %v461
        %v621 = vadd.f32 %v594, %v619
        %v622 = vadd.f32 %v595, %v620
        %623 = vrot.lane.b32.xlu0 %v460, 112
        %v624 = vpop.permute.xlu0 %623
        %625 = vrot.lane.b32.xlu0 %v461, 112
        %v626 = vpop.permute.xlu0 %625
        %v627 = vsel %vm311, %v624, %v626
        %v628 = vsel %vm311, %v626, %v624
        %v629 = vstv %s180
        %v630 = vmul.f32 %v629, %v627
        %v631 = vmul.f32 %v629, %v628
        %v632 = vadd.f32 %v599, %v630
        %v633 = vadd.f32 %v600, %v631
        %v634 = vstv %s189
        %v635 = vmul.f32 %v634, %v627
        %v636 = vmul.f32 %v634, %v628
        %v637 = vadd.f32 %v604, %v635
        %v638 = vadd.f32 %v605, %v636
        %v639 = vstv %s198
        %v640 = vmul.f32 %v639, %v627
        %v641 = vmul.f32 %v639, %v628
        %v642 = vadd.f32 %v609, %v640
        %v643 = vadd.f32 %v610, %v641
        %v644 = vmul.f32 %v371, %v627
        %v645 = vmul.f32 %v371, %v628
        %v646 = vadd.f32 %v613, %v644
        %v647 = vadd.f32 %v614, %v645
        %v648 = vmul.f32 %v376, %v627
        %v649 = vmul.f32 %v376, %v628
        %v650 = vadd.f32 %v617, %v648
        %v651 = vadd.f32 %v618, %v649
        %v652 = vmul.f32 %v381, %v627
        %v653 = vmul.f32 %v381, %v628
        %v654 = vadd.f32 %v621, %v652
        %v655 = vadd.f32 %v622, %v653
        %656 = vrot.lane.b32.xlu0 %v460, 15
        %v657 = vpop.permute.xlu0 %656
        %658 = vrot.lane.b32.xlu0 %v461, 15
        %v659 = vpop.permute.xlu0 %658
        %v660 = vsel %vm390, %v657, %v659
        %v661 = vsel %vm390, %v659, %v657
        %662 = vrot.lane.b32.xlu0 %v460, 127
        %v663 = vpop.permute.xlu0 %662
        %664 = vrot.lane.b32.xlu0 %v461, 127
        %v665 = vpop.permute.xlu0 %664
        %v666 = vsel %vm397, %v663, %v665
        %v667 = vsel %vm397, %v665, %v663
        %v668 = vsel %vm256, %v661, %v666
        %v669 = vsel %vm257, %v660, %v667
        %670 = vrot.lane.b32.xlu0 %v668, 16
        %v671 = vpop.permute.xlu0 %670
        %672 = vrot.lane.b32.xlu0 %v669, 16
        %v673 = vpop.permute.xlu0 %672
        %v674 = vsel %vm280, %v671, %v673
        %v675 = vsel %vm280, %v673, %v671
        %v676 = vstv %s175
        %v677 = vmul.f32 %v676, %v675
        %v678 = vmul.f32 %v676, %v674
        %v679 = vadd.f32 %v632, %v677
        %v680 = vadd.f32 %v633, %v678
        %v681 = vstv %s184
        %v682 = vmul.f32 %v681, %v675
        %v683 = vmul.f32 %v681, %v674
        %v684 = vadd.f32 %v637, %v682
        %v685 = vadd.f32 %v638, %v683
        %v686 = vstv %s193
        %v687 = vmul.f32 %v686, %v675
        %v688 = vmul.f32 %v686, %v674
        %v689 = vadd.f32 %v642, %v687
        %v690 = vadd.f32 %v643, %v688
        %v691 = vmul.f32 %v408, %v675
        %v692 = vmul.f32 %v408, %v674
        %v693 = vadd.f32 %v646, %v691
        %v694 = vadd.f32 %v647, %v692
        %v695 = vmul.f32 %v413, %v675
        %v696 = vmul.f32 %v413, %v674
        %v697 = vadd.f32 %v650, %v695
        %v698 = vadd.f32 %v651, %v696
        %v699 = vmul.f32 %v418, %v675
        %v700 = vmul.f32 %v418, %v674
        %v701 = vadd.f32 %v654, %v699
        %v702 = vadd.f32 %v655, %v700
        %v703 = vstv %s178
        %v704 = vmul.f32 %v703, %v668
        %v705 = vmul.f32 %v703, %v669
        %v706 = vadd.f32 %v679, %v704
        %v707 = vadd.f32 %v680, %v705
        %v708 = vstv %s187
        %v709 = vmul.f32 %v708, %v668
        %v710 = vmul.f32 %v708, %v669
        %v711 = vadd.f32 %v684, %v709
        %v712 = vadd.f32 %v685, %v710
        %v713 = vstv %s196
        %v714 = vmul.f32 %v713, %v668
        %v715 = vmul.f32 %v713, %v669
        %v716 = vadd.f32 %v689, %v714
        %v717 = vadd.f32 %v690, %v715
        %v718 = vmul.f32 %v423, %v668
        %v719 = vmul.f32 %v423, %v669
        %v720 = vadd.f32 %v693, %v718
        %v721 = vadd.f32 %v694, %v719
        %v722 = vmul.f32 %v428, %v668
        %v723 = vmul.f32 %v428, %v669
        %v724 = vadd.f32 %v697, %v722
        %v725 = vadd.f32 %v698, %v723
        %v726 = vmul.f32 %v433, %v668
        %v727 = vmul.f32 %v433, %v669
        %v728 = vadd.f32 %v701, %v726
        %v729 = vadd.f32 %v702, %v727
        %730 = vrot.lane.b32.xlu0 %v668, 112
        %v731 = vpop.permute.xlu0 %730
        %732 = vrot.lane.b32.xlu0 %v669, 112
        %v733 = vpop.permute.xlu0 %732
        %v734 = vsel %vm311, %v731, %v733
        %v735 = vsel %vm311, %v733, %v731
        %v736 = vstv %s181
        %v737 = vmul.f32 %v736, %v734
        %v738 = vmul.f32 %v736, %v735
        %v739 = vadd.f32 %v706, %v737
        %v740 = vadd.f32 %v707, %v738
        %v741 = vstv %s190
        %v742 = vmul.f32 %v741, %v734
        %v743 = vmul.f32 %v741, %v735
        %v744 = vadd.f32 %v711, %v742
        %v745 = vadd.f32 %v712, %v743
        %v746 = vstv %s199
        %v747 = vmul.f32 %v746, %v734
        %v748 = vmul.f32 %v746, %v735
        %v749 = vadd.f32 %v716, %v747
        %v750 = vadd.f32 %v717, %v748
        %v751 = vmul.f32 %v444, %v734
        %v752 = vmul.f32 %v444, %v735
        %v753 = vadd.f32 %v720, %v751
        %v754 = vadd.f32 %v721, %v752
        %v755 = vmul.f32 %v449, %v734
        %v756 = vmul.f32 %v449, %v735
        %v757 = vadd.f32 %v724, %v755
        %v758 = vadd.f32 %v725, %v756
        %v759 = vmul.f32 %v454, %v734
        %v760 = vmul.f32 %v454, %v735
        %v761 = vadd.f32 %v728, %v759
        %v762 = vadd.f32 %v729, %v760
        %s763 = scalar_lea.vmem %s126, 32 [#allocation4]
        %v764 = vld [vmem:[%s763] sm:$0xff]
        %v765 = vld [vmem:[%s763 + $0x8] sm:$0xff]
        %766 = vrot.lane.b32.xlu0 %v764, 113
        %v767 = vpop.permute.xlu0 %766
        %768 = vrot.lane.b32.xlu0 %v765, 113
        %v769 = vpop.permute.xlu0 %768
        %v770 = vsel %vm264, %v767, %v769
        %v771 = vsel %vm264, %v769, %v767
        %772 = vrot.lane.b32.xlu0 %v764, 1
        %v773 = vpop.permute.xlu0 %772
        %774 = vrot.lane.b32.xlu0 %v765, 1
        %v775 = vpop.permute.xlu0 %774
        %v776 = vsel %vm271, %v773, %v775
        %v777 = vsel %vm271, %v775, %v773
        %v778 = vsel %vm254, %v770, %v777
        %v779 = vsel %vm255, %v771, %v776
        %780 = vrot.lane.b32.xlu0 %v778, 16
        %v781 = vpop.permute.xlu0 %780
        %782 = vrot.lane.b32.xlu0 %v779, 16
        %v783 = vpop.permute.xlu0 %782
        %v784 = vsel %vm280, %v781, %v783
        %v785 = vsel %vm280, %v783, %v781
        %v786 = vstv %s200
        %v787 = vmul.f32 %v786, %v785
        %v788 = vmul.f32 %v786, %v784
        %v789 = vadd.f32 %v739, %v787
        %v790 = vadd.f32 %v740, %v788
        %v791 = vstv %s209
        %v792 = vmul.f32 %v791, %v785
        %v793 = vmul.f32 %v791, %v784
        %v794 = vadd.f32 %v744, %v792
        %v795 = vadd.f32 %v745, %v793
        %v796 = vstv %s218
        %v797 = vmul.f32 %v796, %v785
        %v798 = vmul.f32 %v796, %v784
        %v799 = vadd.f32 %v749, %v797
        %v800 = vadd.f32 %v750, %v798
        %v801 = vmul.f32 %v283, %v785
        %v802 = vmul.f32 %v283, %v784
        %v803 = vmul.f32 %v286, %v785
        %v804 = vmul.f32 %v286, %v784
        %v805 = vmul.f32 %v289, %v785
        %v806 = vmul.f32 %v289, %v784
        %v807 = vstv %s203
        %v808 = vmul.f32 %v807, %v778
        %v809 = vmul.f32 %v807, %v779
        %v810 = vadd.f32 %v789, %v808
        %v811 = vadd.f32 %v790, %v809
        %v812 = vstv %s212
        %v813 = vmul.f32 %v812, %v778
        %v814 = vmul.f32 %v812, %v779
        %v815 = vadd.f32 %v794, %v813
        %v816 = vadd.f32 %v795, %v814
        %v817 = vstv %s221
        %v818 = vmul.f32 %v817, %v778
        %v819 = vmul.f32 %v817, %v779
        %v820 = vadd.f32 %v799, %v818
        %v821 = vadd.f32 %v800, %v819
        %v822 = vmul.f32 %v292, %v778
        %v823 = vmul.f32 %v292, %v779
        %v824 = vadd.f32 %v801, %v822
        %v825 = vadd.f32 %v802, %v823
        %v826 = vmul.f32 %v297, %v778
        %v827 = vmul.f32 %v297, %v779
        %v828 = vadd.f32 %v803, %v826
        %v829 = vadd.f32 %v804, %v827
        %v830 = vmul.f32 %v302, %v778
        %v831 = vmul.f32 %v302, %v779
        %v832 = vadd.f32 %v805, %v830
        %v833 = vadd.f32 %v806, %v831
        %834 = vrot.lane.b32.xlu0 %v778, 112
        %v835 = vpop.permute.xlu0 %834
        %836 = vrot.lane.b32.xlu0 %v779, 112
        %v837 = vpop.permute.xlu0 %836
        %v838 = vsel %vm311, %v835, %v837
        %v839 = vsel %vm311, %v837, %v835
        %v840 = vstv %s206
        %v841 = vmul.f32 %v840, %v838
        %v842 = vmul.f32 %v840, %v839
        %v843 = vadd.f32 %v810, %v841
        %v844 = vadd.f32 %v811, %v842
        %v845 = vstv %s215
        %v846 = vmul.f32 %v845, %v838
        %v847 = vmul.f32 %v845, %v839
        %v848 = vadd.f32 %v815, %v846
        %v849 = vadd.f32 %v816, %v847
        %v850 = vstv %s224
        %v851 = vmul.f32 %v850, %v838
        %v852 = vmul.f32 %v850, %v839
        %v853 = vadd.f32 %v820, %v851
        %v854 = vadd.f32 %v821, %v852
        %v855 = vmul.f32 %v314, %v838
        %v856 = vmul.f32 %v314, %v839
        %v857 = vadd.f32 %v824, %v855
        %v858 = vadd.f32 %v825, %v856
        %v859 = vmul.f32 %v319, %v838
        %v860 = vmul.f32 %v319, %v839
        %v861 = vadd.f32 %v828, %v859
        %v862 = vadd.f32 %v829, %v860
        %v863 = vmul.f32 %v324, %v838
        %v864 = vmul.f32 %v324, %v839
        %v865 = vadd.f32 %v832, %v863
        %v866 = vadd.f32 %v833, %v864
        %867 = vrot.lane.b32.xlu0 %v764, 16
        %v868 = vpop.permute.xlu0 %867
        %869 = vrot.lane.b32.xlu0 %v765, 16
        %v870 = vpop.permute.xlu0 %869
        %v871 = vsel %vm280, %v868, %v870
        %v872 = vsel %vm280, %v870, %v868
        %v873 = vstv %s201
        %v874 = vmul.f32 %v873, %v872
        %v875 = vmul.f32 %v873, %v871
        %v876 = vadd.f32 %v843, %v874
        %v877 = vadd.f32 %v844, %v875
        %v878 = vstv %s210
        %v879 = vmul.f32 %v878, %v872
        %v880 = vmul.f32 %v878, %v871
        %v881 = vadd.f32 %v848, %v879
        %v882 = vadd.f32 %v849, %v880
        %v883 = vstv %s219
        %v884 = vmul.f32 %v883, %v872
        %v885 = vmul.f32 %v883, %v871
        %v886 = vadd.f32 %v853, %v884
        %v887 = vadd.f32 %v854, %v885
        %v888 = vmul.f32 %v335, %v872
        %v889 = vmul.f32 %v335, %v871
        %v890 = vadd.f32 %v857, %v888
        %v891 = vadd.f32 %v858, %v889
        %v892 = vmul.f32 %v340, %v872
        %v893 = vmul.f32 %v340, %v871
        %v894 = vadd.f32 %v861, %v892
        %v895 = vadd.f32 %v862, %v893
        %v896 = vmul.f32 %v345, %v872
        %v897 = vmul.f32 %v345, %v871
        %v898 = vadd.f32 %v865, %v896
        %v899 = vadd.f32 %v866, %v897
        %v900 = vstv %s204
        %v901 = vmul.f32 %v900, %v764
        %v902 = vmul.f32 %v900, %v765
        %v903 = vadd.f32 %v876, %v901
        %v904 = vadd.f32 %v877, %v902
        %v905 = vstv %s213
        %v906 = vmul.f32 %v905, %v764
        %v907 = vmul.f32 %v905, %v765
        %v908 = vadd.f32 %v881, %v906
        %v909 = vadd.f32 %v882, %v907
        %v910 = vstv %s222
        %v911 = vmul.f32 %v910, %v764
        %v912 = vmul.f32 %v910, %v765
        %v913 = vadd.f32 %v886, %v911
        %v914 = vadd.f32 %v887, %v912
        %v915 = vmul.f32 %v350, %v764
        %v916 = vmul.f32 %v350, %v765
        %v917 = vadd.f32 %v890, %v915
        %v918 = vadd.f32 %v891, %v916
        %v919 = vmul.f32 %v355, %v764
        %v920 = vmul.f32 %v355, %v765
        %v921 = vadd.f32 %v894, %v919
        %v922 = vadd.f32 %v895, %v920
        %v923 = vmul.f32 %v360, %v764
        %v924 = vmul.f32 %v360, %v765
        %v925 = vadd.f32 %v898, %v923
        %v926 = vadd.f32 %v899, %v924
        %927 = vrot.lane.b32.xlu0 %v764, 112
        %v928 = vpop.permute.xlu0 %927
        %929 = vrot.lane.b32.xlu0 %v765, 112
        %v930 = vpop.permute.xlu0 %929
        %v931 = vsel %vm311, %v928, %v930
        %v932 = vsel %vm311, %v930, %v928
        %v933 = vstv %s207
        %v934 = vmul.f32 %v933, %v931
        %v935 = vmul.f32 %v933, %v932
        %v936 = vadd.f32 %v903, %v934
        %v937 = vadd.f32 %v904, %v935
        %v938 = vstv %s216
        %v939 = vmul.f32 %v938, %v931
        %v940 = vmul.f32 %v938, %v932
        %v941 = vadd.f32 %v908, %v939
        %v942 = vadd.f32 %v909, %v940
        %v943 = vstv %s225
        %v944 = vmul.f32 %v943, %v931
        %v945 = vmul.f32 %v943, %v932
        %v946 = vadd.f32 %v913, %v944
        %v947 = vadd.f32 %v914, %v945
        %v948 = vmul.f32 %v371, %v931
        %v949 = vmul.f32 %v371, %v932
        %v950 = vadd.f32 %v917, %v948
        %v951 = vadd.f32 %v918, %v949
        %v952 = vmul.f32 %v376, %v931
        %v953 = vmul.f32 %v376, %v932
        %v954 = vadd.f32 %v921, %v952
        %v955 = vadd.f32 %v922, %v953
        %v956 = vmul.f32 %v381, %v931
        %v957 = vmul.f32 %v381, %v932
        %v958 = vadd.f32 %v925, %v956
        %v959 = vadd.f32 %v926, %v957
        %960 = vrot.lane.b32.xlu0 %v764, 15
        %v961 = vpop.permute.xlu0 %960
        %962 = vrot.lane.b32.xlu0 %v765, 15
        %v963 = vpop.permute.xlu0 %962
        %v964 = vsel %vm390, %v961, %v963
        %v965 = vsel %vm390, %v963, %v961
        %966 = vrot.lane.b32.xlu0 %v764, 127
        %v967 = vpop.permute.xlu0 %966
        %968 = vrot.lane.b32.xlu0 %v765, 127
        %v969 = vpop.permute.xlu0 %968
        %v970 = vsel %vm397, %v967, %v969
        %v971 = vsel %vm397, %v969, %v967
        %v972 = vsel %vm256, %v965, %v970
        %v973 = vsel %vm257, %v964, %v971
        %974 = vrot.lane.b32.xlu0 %v972, 16
        %v975 = vpop.permute.xlu0 %974
        %976 = vrot.lane.b32.xlu0 %v973, 16
        %v977 = vpop.permute.xlu0 %976
        %v978 = vsel %vm280, %v975, %v977
        %v979 = vsel %vm280, %v977, %v975
        %v980 = vstv %s202
        %v981 = vmul.f32 %v980, %v979
        %v982 = vmul.f32 %v980, %v978
        %v983 = vadd.f32 %v936, %v981
        %v984 = vadd.f32 %v937, %v982
        %v985 = vstv %s211
        %v986 = vmul.f32 %v985, %v979
        %v987 = vmul.f32 %v985, %v978
        %v988 = vadd.f32 %v941, %v986
        %v989 = vadd.f32 %v942, %v987
        %v990 = vstv %s220
        %v991 = vmul.f32 %v990, %v979
        %v992 = vmul.f32 %v990, %v978
        %v993 = vadd.f32 %v946, %v991
        %v994 = vadd.f32 %v947, %v992
        %v995 = vmul.f32 %v408, %v979
        %v996 = vmul.f32 %v408, %v978
        %v997 = vadd.f32 %v950, %v995
        %v998 = vadd.f32 %v951, %v996
        %v999 = vmul.f32 %v413, %v979
        %v1000 = vmul.f32 %v413, %v978
        %v1001 = vadd.f32 %v954, %v999
        %v1002 = vadd.f32 %v955, %v1000
        %v1003 = vmul.f32 %v418, %v979
        %v1004 = vmul.f32 %v418, %v978
        %v1005 = vadd.f32 %v958, %v1003
        %v1006 = vadd.f32 %v959, %v1004
        %v1007 = vstv %s205
        %v1008 = vmul.f32 %v1007, %v972
        %v1009 = vmul.f32 %v1007, %v973
        %v1010 = vadd.f32 %v983, %v1008
        %v1011 = vadd.f32 %v984, %v1009
        %v1012 = vstv %s214
        %v1013 = vmul.f32 %v1012, %v972
        %v1014 = vmul.f32 %v1012, %v973
        %v1015 = vadd.f32 %v988, %v1013
        %v1016 = vadd.f32 %v989, %v1014
        %v1017 = vstv %s223
        %v1018 = vmul.f32 %v1017, %v972
        %v1019 = vmul.f32 %v1017, %v973
        %v1020 = vadd.f32 %v993, %v1018
        %v1021 = vadd.f32 %v994, %v1019
        %v1022 = vmul.f32 %v423, %v972
        %v1023 = vmul.f32 %v423, %v973
        %v1024 = vadd.f32 %v997, %v1022
        %v1025 = vadd.f32 %v998, %v1023
        %v1026 = vmul.f32 %v428, %v972
        %v1027 = vmul.f32 %v428, %v973
        %v1028 = vadd.f32 %v1001, %v1026
        %v1029 = vadd.f32 %v1002, %v1027
        %v1030 = vmul.f32 %v433, %v972
        %v1031 = vmul.f32 %v433, %v973
        %v1032 = vadd.f32 %v1005, %v1030
        %v1033 = vadd.f32 %v1006, %v1031
        %1034 = vrot.lane.b32.xlu0 %v972, 112
        %v1035 = vpop.permute.xlu0 %1034
        %1036 = vrot.lane.b32.xlu0 %v973, 112
        %v1037 = vpop.permute.xlu0 %1036
        %v1038 = vsel %vm311, %v1035, %v1037
        %v1039 = vsel %vm311, %v1037, %v1035
        %v1040 = vstv %s208
        %v1041 = vmul.f32 %v1040, %v1038
        %v1042 = vmul.f32 %v1040, %v1039
        %v1043 = vadd.f32 %v1010, %v1041
        %v1044 = vadd.f32 %v1011, %v1042
        %v1045 = vstv %s217
        %v1046 = vmul.f32 %v1045, %v1038
        %v1047 = vmul.f32 %v1045, %v1039
        %v1048 = vadd.f32 %v1015, %v1046
        %v1049 = vadd.f32 %v1016, %v1047
        %v1050 = vstv %s226
        %v1051 = vmul.f32 %v1050, %v1038
        %v1052 = vmul.f32 %v1050, %v1039
        %v1053 = vadd.f32 %v1020, %v1051
        %v1054 = vadd.f32 %v1021, %v1052
        %v1055 = vmul.f32 %v444, %v1038
        %v1056 = vmul.f32 %v444, %v1039
        %v1057 = vadd.f32 %v1024, %v1055
        %v1058 = vadd.f32 %v1025, %v1056
        %v1059 = vmul.f32 %v449, %v1038
        %v1060 = vmul.f32 %v449, %v1039
        %v1061 = vadd.f32 %v1028, %v1059
        %v1062 = vadd.f32 %v1029, %v1060
        %v1063 = vmul.f32 %v454, %v1038
        %v1064 = vmul.f32 %v454, %v1039
        %v1065 = vadd.f32 %v1032, %v1063
        %v1066 = vadd.f32 %v1033, %v1064
        %s1067 = scalar_lea.vmem %s126, 48 [#allocation4]
        %v1068 = vld [vmem:[%s1067] sm:$0xff]
        %v1069 = vld [vmem:[%s1067 + $0x8] sm:$0xff]
        %1070 = vrot.lane.b32.xlu0 %v1068, 113
        %v1071 = vpop.permute.xlu0 %1070
        %1072 = vrot.lane.b32.xlu0 %v1069, 113
        %v1073 = vpop.permute.xlu0 %1072
        %v1074 = vsel %vm264, %v1071, %v1073
        %v1075 = vsel %vm264, %v1073, %v1071
        %1076 = vrot.lane.b32.xlu0 %v1068, 1
        %v1077 = vpop.permute.xlu0 %1076
        %1078 = vrot.lane.b32.xlu0 %v1069, 1
        %v1079 = vpop.permute.xlu0 %1078
        %v1080 = vsel %vm271, %v1077, %v1079
        %v1081 = vsel %vm271, %v1079, %v1077
        %v1082 = vsel %vm254, %v1074, %v1081
        %v1083 = vsel %vm255, %v1075, %v1080
        %1084 = vrot.lane.b32.xlu0 %v1082, 16
        %v1085 = vpop.permute.xlu0 %1084
        %1086 = vrot.lane.b32.xlu0 %v1083, 16
        %v1087 = vpop.permute.xlu0 %1086
        %v1088 = vsel %vm280, %v1085, %v1087
        %v1089 = vsel %vm280, %v1087, %v1085
        %v1090 = vmul.f32 %v482, %v1089
        %v1091 = vmul.f32 %v482, %v1088
        %v1092 = vadd.f32 %v753, %v1090
        %v1093 = vadd.f32 %v754, %v1091
        %v1094 = vmul.f32 %v487, %v1089
        %v1095 = vmul.f32 %v487, %v1088
        %v1096 = vadd.f32 %v757, %v1094
        %v1097 = vadd.f32 %v758, %v1095
        %v1098 = vmul.f32 %v492, %v1089
        %v1099 = vmul.f32 %v492, %v1088
        %v1100 = vadd.f32 %v761, %v1098
        %v1101 = vadd.f32 %v762, %v1099
        %v1102 = vmul.f32 %v503, %v1082
        %v1103 = vmul.f32 %v503, %v1083
        %v1104 = vadd.f32 %v1092, %v1102
        %v1105 = vadd.f32 %v1093, %v1103
        %v1106 = vmul.f32 %v508, %v1082
        %v1107 = vmul.f32 %v508, %v1083
        %v1108 = vadd.f32 %v1096, %v1106
        %v1109 = vadd.f32 %v1097, %v1107
        %v1110 = vmul.f32 %v513, %v1082
        %v1111 = vmul.f32 %v513, %v1083
        %v1112 = vadd.f32 %v1100, %v1110
        %v1113 = vadd.f32 %v1101, %v1111
        %1114 = vrot.lane.b32.xlu0 %v1082, 112
        %v1115 = vpop.permute.xlu0 %1114
        %1116 = vrot.lane.b32.xlu0 %v1083, 112
        %v1117 = vpop.permute.xlu0 %1116
        %v1118 = vsel %vm311, %v1115, %v1117
        %v1119 = vsel %vm311, %v1117, %v1115
        %v1120 = vmul.f32 %v536, %v1118
        %v1121 = vmul.f32 %v536, %v1119
        %v1122 = vadd.f32 %v1104, %v1120
        %v1123 = vadd.f32 %v1105, %v1121
        %v1124 = vmul.f32 %v541, %v1118
        %v1125 = vmul.f32 %v541, %v1119
        %v1126 = vadd.f32 %v1108, %v1124
        %v1127 = vadd.f32 %v1109, %v1125
        %v1128 = vmul.f32 %v546, %v1118
        %v1129 = vmul.f32 %v546, %v1119
        %v1130 = vadd.f32 %v1112, %v1128
        %v1131 = vadd.f32 %v1113, %v1129
        %1132 = vrot.lane.b32.xlu0 %v1068, 16
        %v1133 = vpop.permute.xlu0 %1132
        %1134 = vrot.lane.b32.xlu0 %v1069, 16
        %v1135 = vpop.permute.xlu0 %1134
        %v1136 = vsel %vm280, %v1133, %v1135
        %v1137 = vsel %vm280, %v1135, %v1133
        %v1138 = vmul.f32 %v569, %v1137
        %v1139 = vmul.f32 %v569, %v1136
        %v1140 = vadd.f32 %v1122, %v1138
        %v1141 = vadd.f32 %v1123, %v1139
        %v1142 = vmul.f32 %v574, %v1137
        %v1143 = vmul.f32 %v574, %v1136
        %v1144 = vadd.f32 %v1126, %v1142
        %v1145 = vadd.f32 %v1127, %v1143
        %v1146 = vmul.f32 %v579, %v1137
        %v1147 = vmul.f32 %v579, %v1136
        %v1148 = vadd.f32 %v1130, %v1146
        %v1149 = vadd.f32 %v1131, %v1147
        %v1150 = vmul.f32 %v596, %v1068
        %v1151 = vmul.f32 %v596, %v1069
        %v1152 = vadd.f32 %v1140, %v1150
        %v1153 = vadd.f32 %v1141, %v1151
        %v1154 = vmul.f32 %v601, %v1068
        %v1155 = vmul.f32 %v601, %v1069
        %v1156 = vadd.f32 %v1144, %v1154
        %v1157 = vadd.f32 %v1145, %v1155
        %v1158 = vmul.f32 %v606, %v1068
        %v1159 = vmul.f32 %v606, %v1069
        %v1160 = vadd.f32 %v1148, %v1158
        %v1161 = vadd.f32 %v1149, %v1159
        %1162 = vrot.lane.b32.xlu0 %v1068, 112
        %v1163 = vpop.permute.xlu0 %1162
        %1164 = vrot.lane.b32.xlu0 %v1069, 112
        %v1165 = vpop.permute.xlu0 %1164
        %v1166 = vsel %vm311, %v1163, %v1165
        %v1167 = vsel %vm311, %v1165, %v1163
        %v1168 = vmul.f32 %v629, %v1166
        %v1169 = vmul.f32 %v629, %v1167
        %v1170 = vadd.f32 %v1152, %v1168
        %v1171 = vadd.f32 %v1153, %v1169
        %v1172 = vmul.f32 %v634, %v1166
        %v1173 = vmul.f32 %v634, %v1167
        %v1174 = vadd.f32 %v1156, %v1172
        %v1175 = vadd.f32 %v1157, %v1173
        %v1176 = vmul.f32 %v639, %v1166
        %v1177 = vmul.f32 %v639, %v1167
        %v1178 = vadd.f32 %v1160, %v1176
        %v1179 = vadd.f32 %v1161, %v1177
        %1180 = vrot.lane.b32.xlu0 %v1068, 15
        %v1181 = vpop.permute.xlu0 %1180
        %1182 = vrot.lane.b32.xlu0 %v1069, 15
        %v1183 = vpop.permute.xlu0 %1182
        %v1184 = vsel %vm390, %v1181, %v1183
        %v1185 = vsel %vm390, %v1183, %v1181
        %1186 = vrot.lane.b32.xlu0 %v1068, 127
        %v1187 = vpop.permute.xlu0 %1186
        %1188 = vrot.lane.b32.xlu0 %v1069, 127
        %v1189 = vpop.permute.xlu0 %1188
        %v1190 = vsel %vm397, %v1187, %v1189
        %v1191 = vsel %vm397, %v1189, %v1187
        %v1192 = vsel %vm256, %v1185, %v1190
        %v1193 = vsel %vm257, %v1184, %v1191
        %1194 = vrot.lane.b32.xlu0 %v1192, 16
        %v1195 = vpop.permute.xlu0 %1194
        %1196 = vrot.lane.b32.xlu0 %v1193, 16
        %v1197 = vpop.permute.xlu0 %1196
        %v1198 = vsel %vm280, %v1195, %v1197
        %v1199 = vsel %vm280, %v1197, %v1195
        %v1200 = vmul.f32 %v676, %v1199
        %v1201 = vmul.f32 %v676, %v1198
        %v1202 = vadd.f32 %v1170, %v1200
        %v1203 = vadd.f32 %v1171, %v1201
        %v1204 = vmul.f32 %v681, %v1199
        %v1205 = vmul.f32 %v681, %v1198
        %v1206 = vadd.f32 %v1174, %v1204
        %v1207 = vadd.f32 %v1175, %v1205
        %v1208 = vmul.f32 %v686, %v1199
        %v1209 = vmul.f32 %v686, %v1198
        %v1210 = vadd.f32 %v1178, %v1208
        %v1211 = vadd.f32 %v1179, %v1209
        %v1212 = vmul.f32 %v703, %v1192
        %v1213 = vmul.f32 %v703, %v1193
        %v1214 = vadd.f32 %v1202, %v1212
        %v1215 = vadd.f32 %v1203, %v1213
        %v1216 = vmul.f32 %v708, %v1192
        %v1217 = vmul.f32 %v708, %v1193
        %v1218 = vadd.f32 %v1206, %v1216
        %v1219 = vadd.f32 %v1207, %v1217
        %v1220 = vmul.f32 %v713, %v1192
        %v1221 = vmul.f32 %v713, %v1193
        %v1222 = vadd.f32 %v1210, %v1220
        %v1223 = vadd.f32 %v1211, %v1221
        %1224 = vrot.lane.b32.xlu0 %v1192, 112
        %v1225 = vpop.permute.xlu0 %1224
        %1226 = vrot.lane.b32.xlu0 %v1193, 112
        %v1227 = vpop.permute.xlu0 %1226
        %v1228 = vsel %vm311, %v1225, %v1227
        %v1229 = vsel %vm311, %v1227, %v1225
        %v1230 = vmul.f32 %v736, %v1228
        %v1231 = vmul.f32 %v736, %v1229
        %v1232 = vadd.f32 %v1214, %v1230
        %v1233 = vadd.f32 %v1215, %v1231
        %v1234 = vmul.f32 %v741, %v1228
        %v1235 = vmul.f32 %v741, %v1229
        %v1236 = vadd.f32 %v1218, %v1234
        %v1237 = vadd.f32 %v1219, %v1235
        %v1238 = vmul.f32 %v746, %v1228
        %v1239 = vmul.f32 %v746, %v1229
        %v1240 = vadd.f32 %v1222, %v1238
        %v1241 = vadd.f32 %v1223, %v1239
        %s1242 = scalar_lea.vmem %s126, 64 [#allocation4]
        %v1243 = vld [vmem:[%s1242] sm:$0xff]
        %v1244 = vld [vmem:[%s1242 + $0x8] sm:$0xff]
        %1245 = vrot.lane.b32.xlu0 %v1243, 113
        %v1246 = vpop.permute.xlu0 %1245
        %1247 = vrot.lane.b32.xlu0 %v1244, 113
        %v1248 = vpop.permute.xlu0 %1247
        %v1249 = vsel %vm264, %v1246, %v1248
        %v1250 = vsel %vm264, %v1248, %v1246
        %1251 = vrot.lane.b32.xlu0 %v1243, 1
        %v1252 = vpop.permute.xlu0 %1251
        %1253 = vrot.lane.b32.xlu0 %v1244, 1
        %v1254 = vpop.permute.xlu0 %1253
        %v1255 = vsel %vm271, %v1252, %v1254
        %v1256 = vsel %vm271, %v1254, %v1252
        %v1257 = vsel %vm254, %v1249, %v1256
        %v1258 = vsel %vm255, %v1250, %v1255
        %1259 = vrot.lane.b32.xlu0 %v1257, 16
        %v1260 = vpop.permute.xlu0 %1259
        %1261 = vrot.lane.b32.xlu0 %v1258, 16
        %v1262 = vpop.permute.xlu0 %1261
        %v1263 = vsel %vm280, %v1260, %v1262
        %v1264 = vsel %vm280, %v1262, %v1260
        %v1265 = vmul.f32 %v786, %v1264
        %v1266 = vmul.f32 %v786, %v1263
        %v1267 = vadd.f32 %v1232, %v1265
        %v1268 = vadd.f32 %v1233, %v1266
        %v1269 = vmul.f32 %v791, %v1264
        %v1270 = vmul.f32 %v791, %v1263
        %v1271 = vadd.f32 %v1236, %v1269
        %v1272 = vadd.f32 %v1237, %v1270
        %v1273 = vmul.f32 %v796, %v1264
        %v1274 = vmul.f32 %v796, %v1263
        %v1275 = vadd.f32 %v1240, %v1273
        %v1276 = vadd.f32 %v1241, %v1274
        %v1277 = vmul.f32 %v482, %v1264
        %v1278 = vmul.f32 %v482, %v1263
        %v1279 = vadd.f32 %v1057, %v1277
        %v1280 = vadd.f32 %v1058, %v1278
        %v1281 = vmul.f32 %v487, %v1264
        %v1282 = vmul.f32 %v487, %v1263
        %v1283 = vadd.f32 %v1061, %v1281
        %v1284 = vadd.f32 %v1062, %v1282
        %v1285 = vmul.f32 %v492, %v1264
        %v1286 = vmul.f32 %v492, %v1263
        %v1287 = vadd.f32 %v1065, %v1285
        %v1288 = vadd.f32 %v1066, %v1286
        %v1289 = vmul.f32 %v807, %v1257
        %v1290 = vmul.f32 %v807, %v1258
        %v1291 = vadd.f32 %v1267, %v1289
        %v1292 = vadd.f32 %v1268, %v1290
        %v1293 = vmul.f32 %v812, %v1257
        %v1294 = vmul.f32 %v812, %v1258
        %v1295 = vadd.f32 %v1271, %v1293
        %v1296 = vadd.f32 %v1272, %v1294
        %v1297 = vmul.f32 %v817, %v1257
        %v1298 = vmul.f32 %v817, %v1258
        %v1299 = vadd.f32 %v1275, %v1297
        %v1300 = vadd.f32 %v1276, %v1298
        %v1301 = vmul.f32 %v503, %v1257
        %v1302 = vmul.f32 %v503, %v1258
        %v1303 = vadd.f32 %v1279, %v1301
        %v1304 = vadd.f32 %v1280, %v1302
        %v1305 = vmul.f32 %v508, %v1257
        %v1306 = vmul.f32 %v508, %v1258
        %v1307 = vadd.f32 %v1283, %v1305
        %v1308 = vadd.f32 %v1284, %v1306
        %v1309 = vmul.f32 %v513, %v1257
        %v1310 = vmul.f32 %v513, %v1258
        %v1311 = vadd.f32 %v1287, %v1309
        %v1312 = vadd.f32 %v1288, %v1310
        %1313 = vrot.lane.b32.xlu0 %v1257, 112
        %v1314 = vpop.permute.xlu0 %1313
        %1315 = vrot.lane.b32.xlu0 %v1258, 112
        %v1316 = vpop.permute.xlu0 %1315
        %v1317 = vsel %vm311, %v1314, %v1316
        %v1318 = vsel %vm311, %v1316, %v1314
        %v1319 = vmul.f32 %v840, %v1317
        %v1320 = vmul.f32 %v840, %v1318
        %v1321 = vadd.f32 %v1291, %v1319
        %v1322 = vadd.f32 %v1292, %v1320
        %v1323 = vmul.f32 %v845, %v1317
        %v1324 = vmul.f32 %v845, %v1318
        %v1325 = vadd.f32 %v1295, %v1323
        %v1326 = vadd.f32 %v1296, %v1324
        %v1327 = vmul.f32 %v850, %v1317
        %v1328 = vmul.f32 %v850, %v1318
        %v1329 = vadd.f32 %v1299, %v1327
        %v1330 = vadd.f32 %v1300, %v1328
        %v1331 = vmul.f32 %v536, %v1317
        %v1332 = vmul.f32 %v536, %v1318
        %v1333 = vadd.f32 %v1303, %v1331
        %v1334 = vadd.f32 %v1304, %v1332
        %v1335 = vmul.f32 %v541, %v1317
        %v1336 = vmul.f32 %v541, %v1318
        %v1337 = vadd.f32 %v1307, %v1335
        %v1338 = vadd.f32 %v1308, %v1336
        %v1339 = vmul.f32 %v546, %v1317
        %v1340 = vmul.f32 %v546, %v1318
        %v1341 = vadd.f32 %v1311, %v1339
        %v1342 = vadd.f32 %v1312, %v1340
        %1343 = vrot.lane.b32.xlu0 %v1243, 16
        %v1344 = vpop.permute.xlu0 %1343
        %1345 = vrot.lane.b32.xlu0 %v1244, 16
        %v1346 = vpop.permute.xlu0 %1345
        %v1347 = vsel %vm280, %v1344, %v1346
        %v1348 = vsel %vm280, %v1346, %v1344
        %v1349 = vmul.f32 %v873, %v1348
        %v1350 = vmul.f32 %v873, %v1347
        %v1351 = vadd.f32 %v1321, %v1349
        %v1352 = vadd.f32 %v1322, %v1350
        %v1353 = vmul.f32 %v878, %v1348
        %v1354 = vmul.f32 %v878, %v1347
        %v1355 = vadd.f32 %v1325, %v1353
        %v1356 = vadd.f32 %v1326, %v1354
        %v1357 = vmul.f32 %v883, %v1348
        %v1358 = vmul.f32 %v883, %v1347
        %v1359 = vadd.f32 %v1329, %v1357
        %v1360 = vadd.f32 %v1330, %v1358
        %v1361 = vmul.f32 %v569, %v1348
        %v1362 = vmul.f32 %v569, %v1347
        %v1363 = vadd.f32 %v1333, %v1361
        %v1364 = vadd.f32 %v1334, %v1362
        %v1365 = vmul.f32 %v574, %v1348
        %v1366 = vmul.f32 %v574, %v1347
        %v1367 = vadd.f32 %v1337, %v1365
        %v1368 = vadd.f32 %v1338, %v1366
        %v1369 = vmul.f32 %v579, %v1348
        %v1370 = vmul.f32 %v579, %v1347
        %v1371 = vadd.f32 %v1341, %v1369
        %v1372 = vadd.f32 %v1342, %v1370
        %v1373 = vmul.f32 %v900, %v1243
        %v1374 = vmul.f32 %v900, %v1244
        %v1375 = vadd.f32 %v1351, %v1373
        %v1376 = vadd.f32 %v1352, %v1374
        %v1377 = vmul.f32 %v905, %v1243
        %v1378 = vmul.f32 %v905, %v1244
        %v1379 = vadd.f32 %v1355, %v1377
        %v1380 = vadd.f32 %v1356, %v1378
        %v1381 = vmul.f32 %v910, %v1243
        %v1382 = vmul.f32 %v910, %v1244
        %v1383 = vadd.f32 %v1359, %v1381
        %v1384 = vadd.f32 %v1360, %v1382
        %v1385 = vmul.f32 %v596, %v1243
        %v1386 = vmul.f32 %v596, %v1244
        %v1387 = vadd.f32 %v1363, %v1385
        %v1388 = vadd.f32 %v1364, %v1386
        %v1389 = vmul.f32 %v601, %v1243
        %v1390 = vmul.f32 %v601, %v1244
        %v1391 = vadd.f32 %v1367, %v1389
        %v1392 = vadd.f32 %v1368, %v1390
        %v1393 = vmul.f32 %v606, %v1243
        %v1394 = vmul.f32 %v606, %v1244
        %v1395 = vadd.f32 %v1371, %v1393
        %v1396 = vadd.f32 %v1372, %v1394
        %1397 = vrot.lane.b32.xlu0 %v1243, 112
        %v1398 = vpop.permute.xlu0 %1397
        %1399 = vrot.lane.b32.xlu0 %v1244, 112
        %v1400 = vpop.permute.xlu0 %1399
        %v1401 = vsel %vm311, %v1398, %v1400
        %v1402 = vsel %vm311, %v1400, %v1398
        %v1403 = vmul.f32 %v933, %v1401
        %v1404 = vmul.f32 %v933, %v1402
        %v1405 = vadd.f32 %v1375, %v1403
        %v1406 = vadd.f32 %v1376, %v1404
        %v1407 = vmul.f32 %v938, %v1401
        %v1408 = vmul.f32 %v938, %v1402
        %v1409 = vadd.f32 %v1379, %v1407
        %v1410 = vadd.f32 %v1380, %v1408
        %v1411 = vmul.f32 %v943, %v1401
        %v1412 = vmul.f32 %v943, %v1402
        %v1413 = vadd.f32 %v1383, %v1411
        %v1414 = vadd.f32 %v1384, %v1412
        %v1415 = vmul.f32 %v629, %v1401
        %v1416 = vmul.f32 %v629, %v1402
        %v1417 = vadd.f32 %v1387, %v1415
        %v1418 = vadd.f32 %v1388, %v1416
        %v1419 = vmul.f32 %v634, %v1401
        %v1420 = vmul.f32 %v634, %v1402
        %v1421 = vadd.f32 %v1391, %v1419
        %v1422 = vadd.f32 %v1392, %v1420
        %v1423 = vmul.f32 %v639, %v1401
        %v1424 = vmul.f32 %v639, %v1402
        %v1425 = vadd.f32 %v1395, %v1423
        %v1426 = vadd.f32 %v1396, %v1424
        %1427 = vrot.lane.b32.xlu0 %v1243, 15
        %v1428 = vpop.permute.xlu0 %1427
        %1429 = vrot.lane.b32.xlu0 %v1244, 15
        %v1430 = vpop.permute.xlu0 %1429
        %v1431 = vsel %vm390, %v1428, %v1430
        %v1432 = vsel %vm390, %v1430, %v1428
        %1433 = vrot.lane.b32.xlu0 %v1243, 127
        %v1434 = vpop.permute.xlu0 %1433
        %1435 = vrot.lane.b32.xlu0 %v1244, 127
        %v1436 = vpop.permute.xlu0 %1435
        %v1437 = vsel %vm397, %v1434, %v1436
        %v1438 = vsel %vm397, %v1436, %v1434
        %v1439 = vsel %vm256, %v1432, %v1437
        %v1440 = vsel %vm257, %v1431, %v1438
        %1441 = vrot.lane.b32.xlu0 %v1439, 16
        %v1442 = vpop.permute.xlu0 %1441
        %1443 = vrot.lane.b32.xlu0 %v1440, 16
        %v1444 = vpop.permute.xlu0 %1443
        %v1445 = vsel %vm280, %v1442, %v1444
        %v1446 = vsel %vm280, %v1444, %v1442
        %v1447 = vmul.f32 %v980, %v1446
        %v1448 = vmul.f32 %v980, %v1445
        %v1449 = vadd.f32 %v1405, %v1447
        %v1450 = vadd.f32 %v1406, %v1448
        %v1451 = vmul.f32 %v985, %v1446
        %v1452 = vmul.f32 %v985, %v1445
        %v1453 = vadd.f32 %v1409, %v1451
        %v1454 = vadd.f32 %v1410, %v1452
        %v1455 = vmul.f32 %v990, %v1446
        %v1456 = vmul.f32 %v990, %v1445
        %v1457 = vadd.f32 %v1413, %v1455
        %v1458 = vadd.f32 %v1414, %v1456
        %v1459 = vmul.f32 %v676, %v1446
        %v1460 = vmul.f32 %v676, %v1445
        %v1461 = vadd.f32 %v1417, %v1459
        %v1462 = vadd.f32 %v1418, %v1460
        %v1463 = vmul.f32 %v681, %v1446
        %v1464 = vmul.f32 %v681, %v1445
        %v1465 = vadd.f32 %v1421, %v1463
        %v1466 = vadd.f32 %v1422, %v1464
        %v1467 = vmul.f32 %v686, %v1446
        %v1468 = vmul.f32 %v686, %v1445
        %v1469 = vadd.f32 %v1425, %v1467
        %v1470 = vadd.f32 %v1426, %v1468
        %v1471 = vmul.f32 %v1007, %v1439
        %v1472 = vmul.f32 %v1007, %v1440
        %v1473 = vadd.f32 %v1449, %v1471
        %v1474 = vadd.f32 %v1450, %v1472
        %v1475 = vmul.f32 %v1012, %v1439
        %v1476 = vmul.f32 %v1012, %v1440
        %v1477 = vadd.f32 %v1453, %v1475
        %v1478 = vadd.f32 %v1454, %v1476
        %v1479 = vmul.f32 %v1017, %v1439
        %v1480 = vmul.f32 %v1017, %v1440
        %v1481 = vadd.f32 %v1457, %v1479
        %v1482 = vadd.f32 %v1458, %v1480
        %v1483 = vmul.f32 %v703, %v1439
        %v1484 = vmul.f32 %v703, %v1440
        %v1485 = vadd.f32 %v1461, %v1483
        %v1486 = vadd.f32 %v1462, %v1484
        %v1487 = vmul.f32 %v708, %v1439
        %v1488 = vmul.f32 %v708, %v1440
        %v1489 = vadd.f32 %v1465, %v1487
        %v1490 = vadd.f32 %v1466, %v1488
        %v1491 = vmul.f32 %v713, %v1439
        %v1492 = vmul.f32 %v713, %v1440
        %v1493 = vadd.f32 %v1469, %v1491
        %v1494 = vadd.f32 %v1470, %v1492
        %1495 = vrot.lane.b32.xlu0 %v1439, 112
        %v1496 = vpop.permute.xlu0 %1495
        %1497 = vrot.lane.b32.xlu0 %v1440, 112
        %v1498 = vpop.permute.xlu0 %1497
        %v1499 = vsel %vm311, %v1496, %v1498
        %v1500 = vsel %vm311, %v1498, %v1496
        %v1501 = vmul.f32 %v1040, %v1499
        %v1502 = vmul.f32 %v1040, %v1500
        %v1503 = vadd.f32 %v1473, %v1501
        %v1504 = vadd.f32 %v1474, %v1502
        %v1505 = vmul.f32 %v1045, %v1499
        %v1506 = vmul.f32 %v1045, %v1500
        %v1507 = vadd.f32 %v1477, %v1505
        %v1508 = vadd.f32 %v1478, %v1506
        %v1509 = vmul.f32 %v1050, %v1499
        %v1510 = vmul.f32 %v1050, %v1500
        %v1511 = vadd.f32 %v1481, %v1509
        %v1512 = vadd.f32 %v1482, %v1510
        %v1513 = vmul.f32 %v736, %v1499
        %v1514 = vmul.f32 %v736, %v1500
        %v1515 = vadd.f32 %v1485, %v1513
        %v1516 = vadd.f32 %v1486, %v1514
        %v1517 = vmul.f32 %v741, %v1499
        %v1518 = vmul.f32 %v741, %v1500
        %v1519 = vadd.f32 %v1489, %v1517
        %v1520 = vadd.f32 %v1490, %v1518
        %v1521 = vmul.f32 %v746, %v1499
        %v1522 = vmul.f32 %v746, %v1500
        %v1523 = vadd.f32 %v1493, %v1521
        %v1524 = vadd.f32 %v1494, %v1522
        %s1525 = scalar_lea.vmem %s126, 80 [#allocation4]
        %v1526 = vld [vmem:[%s1525] sm:$0xff]
        %v1527 = vld [vmem:[%s1525 + $0x8] sm:$0xff]
        %1528 = vrot.lane.b32.xlu0 %v1526, 113
        %v1529 = vpop.permute.xlu0 %1528
        %1530 = vrot.lane.b32.xlu0 %v1527, 113
        %v1531 = vpop.permute.xlu0 %1530
        %v1532 = vsel %vm264, %v1529, %v1531
        %v1533 = vsel %vm264, %v1531, %v1529
        %1534 = vrot.lane.b32.xlu0 %v1526, 1
        %v1535 = vpop.permute.xlu0 %1534
        %1536 = vrot.lane.b32.xlu0 %v1527, 1
        %v1537 = vpop.permute.xlu0 %1536
        %v1538 = vsel %vm271, %v1535, %v1537
        %v1539 = vsel %vm271, %v1537, %v1535
        %v1540 = vsel %vm254, %v1532, %v1539
        %v1541 = vsel %vm255, %v1533, %v1538
        %1542 = vrot.lane.b32.xlu0 %v1540, 16
        %v1543 = vpop.permute.xlu0 %1542
        %1544 = vrot.lane.b32.xlu0 %v1541, 16
        %v1545 = vpop.permute.xlu0 %1544
        %v1546 = vsel %vm280, %v1543, %v1545
        %v1547 = vsel %vm280, %v1545, %v1543
        %v1548 = vmul.f32 %v786, %v1547
        %v1549 = vmul.f32 %v786, %v1546
        %v1550 = vadd.f32 %v1515, %v1548
        %v1551 = vadd.f32 %v1516, %v1549
        %v1552 = vmul.f32 %v791, %v1547
        %v1553 = vmul.f32 %v791, %v1546
        %v1554 = vadd.f32 %v1519, %v1552
        %v1555 = vadd.f32 %v1520, %v1553
        %v1556 = vmul.f32 %v796, %v1547
        %v1557 = vmul.f32 %v796, %v1546
        %v1558 = vadd.f32 %v1523, %v1556
        %v1559 = vadd.f32 %v1524, %v1557
        %v1560 = vmul.f32 %v807, %v1540
        %v1561 = vmul.f32 %v807, %v1541
        %v1562 = vadd.f32 %v1550, %v1560
        %v1563 = vadd.f32 %v1551, %v1561
        %v1564 = vmul.f32 %v812, %v1540
        %v1565 = vmul.f32 %v812, %v1541
        %v1566 = vadd.f32 %v1554, %v1564
        %v1567 = vadd.f32 %v1555, %v1565
        %v1568 = vmul.f32 %v817, %v1540
        %v1569 = vmul.f32 %v817, %v1541
        %v1570 = vadd.f32 %v1558, %v1568
        %v1571 = vadd.f32 %v1559, %v1569
        %1572 = vrot.lane.b32.xlu0 %v1540, 112
        %v1573 = vpop.permute.xlu0 %1572
        %1574 = vrot.lane.b32.xlu0 %v1541, 112
        %v1575 = vpop.permute.xlu0 %1574
        %v1576 = vsel %vm311, %v1573, %v1575
        %v1577 = vsel %vm311, %v1575, %v1573
        %v1578 = vmul.f32 %v840, %v1576
        %v1579 = vmul.f32 %v840, %v1577
        %v1580 = vadd.f32 %v1562, %v1578
        %v1581 = vadd.f32 %v1563, %v1579
        %v1582 = vmul.f32 %v845, %v1576
        %v1583 = vmul.f32 %v845, %v1577
        %v1584 = vadd.f32 %v1566, %v1582
        %v1585 = vadd.f32 %v1567, %v1583
        %v1586 = vmul.f32 %v850, %v1576
        %v1587 = vmul.f32 %v850, %v1577
        %v1588 = vadd.f32 %v1570, %v1586
        %v1589 = vadd.f32 %v1571, %v1587
        %1590 = vrot.lane.b32.xlu0 %v1526, 16
        %v1591 = vpop.permute.xlu0 %1590
        %1592 = vrot.lane.b32.xlu0 %v1527, 16
        %v1593 = vpop.permute.xlu0 %1592
        %v1594 = vsel %vm280, %v1591, %v1593
        %v1595 = vsel %vm280, %v1593, %v1591
        %v1596 = vmul.f32 %v873, %v1595
        %v1597 = vmul.f32 %v873, %v1594
        %v1598 = vadd.f32 %v1580, %v1596
        %v1599 = vadd.f32 %v1581, %v1597
        %v1600 = vmul.f32 %v878, %v1595
        %v1601 = vmul.f32 %v878, %v1594
        %v1602 = vadd.f32 %v1584, %v1600
        %v1603 = vadd.f32 %v1585, %v1601
        %v1604 = vmul.f32 %v883, %v1595
        %v1605 = vmul.f32 %v883, %v1594
        %v1606 = vadd.f32 %v1588, %v1604
        %v1607 = vadd.f32 %v1589, %v1605
        %v1608 = vmul.f32 %v900, %v1526
        %v1609 = vmul.f32 %v900, %v1527
        %v1610 = vadd.f32 %v1598, %v1608
        %v1611 = vadd.f32 %v1599, %v1609
        %v1612 = vmul.f32 %v905, %v1526
        %v1613 = vmul.f32 %v905, %v1527
        %v1614 = vadd.f32 %v1602, %v1612
        %v1615 = vadd.f32 %v1603, %v1613
        %v1616 = vmul.f32 %v910, %v1526
        %v1617 = vmul.f32 %v910, %v1527
        %v1618 = vadd.f32 %v1606, %v1616
        %v1619 = vadd.f32 %v1607, %v1617
        %1620 = vrot.lane.b32.xlu0 %v1526, 112
        %v1621 = vpop.permute.xlu0 %1620
        %1622 = vrot.lane.b32.xlu0 %v1527, 112
        %v1623 = vpop.permute.xlu0 %1622
        %v1624 = vsel %vm311, %v1621, %v1623
        %v1625 = vsel %vm311, %v1623, %v1621
        %v1626 = vmul.f32 %v933, %v1624
        %v1627 = vmul.f32 %v933, %v1625
        %v1628 = vadd.f32 %v1610, %v1626
        %v1629 = vadd.f32 %v1611, %v1627
        %v1630 = vmul.f32 %v938, %v1624
        %v1631 = vmul.f32 %v938, %v1625
        %v1632 = vadd.f32 %v1614, %v1630
        %v1633 = vadd.f32 %v1615, %v1631
        %v1634 = vmul.f32 %v943, %v1624
        %v1635 = vmul.f32 %v943, %v1625
        %v1636 = vadd.f32 %v1618, %v1634
        %v1637 = vadd.f32 %v1619, %v1635
        %1638 = vrot.lane.b32.xlu0 %v1526, 15
        %v1639 = vpop.permute.xlu0 %1638
        %1640 = vrot.lane.b32.xlu0 %v1527, 15
        %v1641 = vpop.permute.xlu0 %1640
        %v1642 = vsel %vm390, %v1639, %v1641
        %v1643 = vsel %vm390, %v1641, %v1639
        %1644 = vrot.lane.b32.xlu0 %v1526, 127
        %v1645 = vpop.permute.xlu0 %1644
        %1646 = vrot.lane.b32.xlu0 %v1527, 127
        %v1647 = vpop.permute.xlu0 %1646
        %v1648 = vsel %vm397, %v1645, %v1647
        %v1649 = vsel %vm397, %v1647, %v1645
        %v1650 = vsel %vm256, %v1643, %v1648
        %v1651 = vsel %vm257, %v1642, %v1649
        %1652 = vrot.lane.b32.xlu0 %v1650, 16
        %v1653 = vpop.permute.xlu0 %1652
        %1654 = vrot.lane.b32.xlu0 %v1651, 16
        %v1655 = vpop.permute.xlu0 %1654
        %v1656 = vsel %vm280, %v1653, %v1655
        %v1657 = vsel %vm280, %v1655, %v1653
        %v1658 = vmul.f32 %v980, %v1657
        %v1659 = vmul.f32 %v980, %v1656
        %v1660 = vadd.f32 %v1628, %v1658
        %v1661 = vadd.f32 %v1629, %v1659
        %v1662 = vmul.f32 %v985, %v1657
        %v1663 = vmul.f32 %v985, %v1656
        %v1664 = vadd.f32 %v1632, %v1662
        %v1665 = vadd.f32 %v1633, %v1663
        %v1666 = vmul.f32 %v990, %v1657
        %v1667 = vmul.f32 %v990, %v1656
        %v1668 = vadd.f32 %v1636, %v1666
        %v1669 = vadd.f32 %v1637, %v1667
        %v1670 = vmul.f32 %v1007, %v1650
        %v1671 = vmul.f32 %v1007, %v1651
        %v1672 = vadd.f32 %v1660, %v1670
        %v1673 = vadd.f32 %v1661, %v1671
        %v1674 = vmul.f32 %v1012, %v1650
        %v1675 = vmul.f32 %v1012, %v1651
        %v1676 = vadd.f32 %v1664, %v1674
        %v1677 = vadd.f32 %v1665, %v1675
        %v1678 = vmul.f32 %v1017, %v1650
        %v1679 = vmul.f32 %v1017, %v1651
        %v1680 = vadd.f32 %v1668, %v1678
        %v1681 = vadd.f32 %v1669, %v1679
        %1682 = vrot.lane.b32.xlu0 %v1650, 112
        %v1683 = vpop.permute.xlu0 %1682
        %1684 = vrot.lane.b32.xlu0 %v1651, 112
        %v1685 = vpop.permute.xlu0 %1684
        %v1686 = vsel %vm311, %v1683, %v1685
        %v1687 = vsel %vm311, %v1685, %v1683
        %v1688 = vmul.f32 %v1040, %v1686
        %v1689 = vmul.f32 %v1040, %v1687
        %v1690 = vadd.f32 %v1672, %v1688
        %v1691 = vadd.f32 %v1673, %v1689
        %v1692 = vmul.f32 %v1045, %v1686
        %v1693 = vmul.f32 %v1045, %v1687
        %v1694 = vadd.f32 %v1676, %v1692
        %v1695 = vadd.f32 %v1677, %v1693
        %v1696 = vmul.f32 %v1050, %v1686
        %v1697 = vmul.f32 %v1050, %v1687
        %v1698 = vadd.f32 %v1680, %v1696
        %v1699 = vadd.f32 %v1681, %v1697
        %v1700 = vrot.slane %v1043, 7
        %v1701 = vrot.slane %v1044, 7
        %v1702 = vrot.slane %v1053, 1
        %v1703 = vrot.slane %v1054, 1
        %v1704 = vadd.f32 %v1700, %v1048
        %v1705 = vadd.f32 %v1701, %v1049
        %v1706 = vadd.f32 %v1704, %v1702
        %v1707 = vadd.f32 %v1705, %v1703
        %1708 = vst [vmem:[%s145] sm:$0xff] %v1706
        %1709 = vst [vmem:[%s145 + $0x8] sm:$0xff] %v1707
        %v1710 = vrot.slane %v1503, 7
        %v1711 = vrot.slane %v1504, 7
        %v1712 = vrot.slane %v1511, 1
        %v1713 = vrot.slane %v1512, 1
        %v1714 = vadd.f32 %v1710, %v1507
        %v1715 = vadd.f32 %v1711, %v1508
        %v1716 = vadd.f32 %v1714, %v1712
        %v1717 = vadd.f32 %v1715, %v1713
        %s1718 = scalar_lea.vmem %s145, 16 [#allocation7]
        %1719 = vst [vmem:[%s1718] sm:$0xff] %v1716
        %1720 = vst [vmem:[%s1718 + $0x8] sm:$0xff] %v1717
        %v1721 = vrot.slane %v1690, 7
        %v1722 = vrot.slane %v1691, 7
        %v1723 = vrot.slane %v1698, 1
        %v1724 = vrot.slane %v1699, 1
        %v1725 = vadd.f32 %v1721, %v1694
        %v1726 = vadd.f32 %v1722, %v1695
        %v1727 = vadd.f32 %v1725, %v1723
        %v1728 = vadd.f32 %v1726, %v1724
        %s1729 = scalar_lea.vmem %s145, 32 [#allocation7]
        %1730 = vst [vmem:[%s1729] sm:$0xff] %v1727
        %1731 = vst [vmem:[%s1729 + $0x8] sm:$0xff] %v1728
        %s1732 = sand.u32 %s61, 1
        %s1733 = scalar_lea.sflag [#allocation6], %s1732
        %s1734 = sand.u32 %s61, 1
        %s1735 = smul.addr %s1734, 48
        %s1736 = scalar_lea.vmem [#allocation7], %s1735
        // Predicated region
        $region29: #{tpu_custom_call.1} parent=23 // pred_check
          %p1737 = pneg %p71
        $region30: #{tpu_custom_call.1} parent=23 // pred_check_branch
          %1739 = sbr.rel (%p1737) target = $region32
        $region31: #{tpu_custom_call.1} parent=23 // pred_region
          %1741 = vsyncadd %s1733, 0
          %s1742 = smul.addr %s27, 6
          %s1743 = smul.addr %s1742, 8
          %s1744 = scalar_lea.hbm %s2, %s1743
          %s1745 = sshll.u32 %s1736, 4
          %s1746 = int_to_ptr.vmem [resolvable:$true] %s1745
          %s1747 = sshll.u32 %s1744, 4
          %s1748 = int_to_ptr.hbm [resolvable:$true] %s1747
          %1753 = dma.vmem_to_hbm [thread:$0]  %s1746, 768, %s1748, %s1733, 256, 256, 16
        $region32: #{tpu_custom_call.1} parent=23 // pred_fallthru
          _
      $region24: #{tpu_custom_call.1} parent=5 // pred_fallthru
        _
      %p1754 = scmp.le.s32.totalorder 2, %s22
      // Predicated region
      $region33: #{tpu_custom_call.1} parent=5 // pred_check
        %p1755 = pneg %p1754
      $region34: #{tpu_custom_call.1} parent=5 // pred_check_branch
        %1757 = sbr.rel (%p1755) target = $region36
      $region35: #{tpu_custom_call.1} parent=5 // pred_region
        %s1758 = ssub.s32 %s22, 2
        // Predicated region
        $region37: #{tpu_custom_call.1} parent=35 // pred_check
          %p1759 = pneg %p77
        $region38: #{tpu_custom_call.1} parent=35 // pred_check_branch
          %1761 = sbr.rel (%p1759) target = $region40
        $region39: #{tpu_custom_call.1} parent=35 // pred_region
          %s1762 = sand.u32 %s62, 1
          %s1763 = scalar_lea.sflag [#allocation6], %s1762
          %s1764 = sand.u32 %s62, 1
          %s1765 = smul.addr %s1764, 48
          %s1766 = scalar_lea.vmem [#allocation7], %s1765
          %1768 = dma.done %s1763, 768
        $region40: #{tpu_custom_call.1} parent=35 // pred_fallthru
          _
      $region36: #{tpu_custom_call.1} parent=5 // pred_fallthru
        _
    $region6: #{tpu_custom_call.1} parent=1 // loop_footer
      %s26 = sadd.s32 1, %s22
    $region7: #{tpu_custom_call.1} parent=1 // loop_footer_branch
      %21 = sbr.rel target = $region3
    $region8: #{tpu_custom_call.1} parent=1 // loop_exit
      _
    %1769 = vsyncpa [#allocation5], 1
    %s1770 = scalar_lea.sflag [#allocation5], 1
    %1771 = vsyncpa %s1770, 1
    %1772 = vsyncpa [#allocation6], 1
    %s1773 = scalar_lea.sflag [#allocation6], 1
    %1774 = vsyncpa %s1773, 1

</llo_original>
